<compile_context>
chip_gen: v7x
topology: tpu7x:2x2x1
jax: 0.10.0
libtpu: 0.0.40
codegen_flags: <defaults>
</compile_context>

<pallas_src>
import functools

import numpy as np

import jax
import jax.numpy as jnp
from jax import lax
from jax.experimental import pallas as pl
from jax.experimental.pallas import tpu as pltpu

OUT_DIM = 128
_LANES = 128
_TILE_CANDS = (1024, 512, 256, 128)


def _round_up(x, m):
    return ((x + m - 1) // m) * m


def _choose_tm(m, max_tm=1024):
    """Largest power-of-two row tile keeping >=4 grid steps (>=2 per v7x core),
    falling back to >=2 steps, then a single step with the smallest covering tile."""
    cands = [t for t in _TILE_CANDS if t <= max_tm]
    for min_steps in (4, 2):
        for t in cands:                      # descending
            if pl.cdiv(m, t) >= min_steps:
                return t
    for t in reversed(cands):                # ascending: single-step, smallest cover
        if t >= m:
            return t
    return cands[0]


def _build_segsum(anchors, num_classes, ad, p_pack):
    """Constant block-diagonal 0/1 segment-sum matrix over the activation copy
    region [ad, 2*ad): quat groups (4 cols) and class groups (num_classes cols)."""
    D = 8 + num_classes
    g = np.zeros((p_pack, p_pack), np.float32)
    for a in range(anchors):
        base = ad + a * D
        g[base:base + 4, base:base + 4] = 1.0
        g[base + 8:base + 8 + num_classes, base + 8:base + 8 + num_classes] = 1.0
    return jnp.asarray(g, dtype=jnp.bfloat16)


# ----------------------------------------------------------------------------
# Fused Pallas kernel: encoder -> concat -> det head -> activations
# ----------------------------------------------------------------------------
def _fused_kernel(*refs, n_views, in_ch, feat_dim, anchors, num_classes, ad, p_pack):
    """Per row tile of tm flattened spatial positions.

    inputs : n_views x (tm, in_ch), enc_w (in_ch, F), enc_b (1, F),
             det_w (F*n_views, P) bf16 with cols [0:ad)=W and [ad:2ad)=W (dup),
             det_b (1, P) f32 (same duplication), segsum (P, P) bf16.
    outputs: n_views x (tm, F) feats, (tm, P) packed slab
             (cols [0:ad) = raw logits, cols [ad:2ad) = activated outputs).
    P (= p_pack) is a multiple of 128 so every HBM-facing store is lane dense.
    """
    x_refs = refs[:n_views]
    enc_w_ref = refs[n_views]
    enc_b_ref = refs[n_views + 1]
    det_w_ref = refs[n_views + 2]
    det_b_ref = refs[n_views + 3]
    seg_ref = refs[n_views + 4]
    feat_refs = refs[n_views + 5:2 * n_views + 5]
    out_ref = refs[2 * n_views + 5]

    D = 8 + num_classes
    tm = x_refs[0].shape[0]
    enc_b = enc_b_ref[...]                                     # (1, F)
    if in_ch <= 8:
        bias_tile = jnp.broadcast_to(enc_b, (tm, feat_dim))    # hoisted once

    # ---- encoder: 1x1 conv + ReLU per view ---------------------------------
    feats = []
    for v in range(n_views):
        x = x_refs[v][...]                                     # (tm, in_ch) f32
        if in_ch <= 8:
            # Tiny contraction dim: VPU broadcast-multiply-adds instead of a
            # lane-sparse K=in_ch MXU matmul.
            acc = bias_tile
            for c in range(in_ch):
                acc = acc + x[:, c:c + 1] * enc_w_ref[c:c + 1, :]
        else:
            acc = jnp.dot(x, enc_w_ref[...],
                          preferred_element_type=jnp.float32) + enc_b
        f = jnp.maximum(acc, 0.0)                              # ReLU
        feat_refs[v][...] = f
        feats.append(f)

    # ---- fusion (channel concat) + det head (bf16 MXU, f32 acc) ------------
    fused = feats[0] if n_views == 1 else jnp.concatenate(feats, axis=-1)
    raw = jnp.dot(fused.astype(jnp.bfloat16), det_w_ref[...],
                  preferred_element_type=jnp.float32) + det_b_ref[...]  # (tm, P)

    # ---- full-width activations on the duplicated copy region [ad, 2*ad) ---
    # Column-role masks (comparison chains on a single (1, P) iota vreg).
    col = lax.broadcasted_iota(jnp.int32, (1, p_pack), 1)
    is_quat = is_conf = is_cls = None
    for a in range(anchors):
        base = ad + a * D
        q = (col >= base) & (col < base + 4)
        c = (col == base + 7)
        s = (col >= base + 8) & (col < base + 8 + num_classes)
        is_quat = q if is_quat is None else (is_quat | q)
        is_conf = c if is_conf is None else (is_conf | c)
        is_cls = s if is_cls is None else (is_cls | s)

    # Row-global class-logit max: constant within every softmax group, so the
    # softmax result is unchanged while exp() stays <= 1 (no overflow).
    m_row = jnp.max(jnp.where(is_cls, raw, jnp.float32(-1e30)),
                    axis=-1, keepdims=True)                     # (tm, 1)

    # ONE full-width exp (EUP): exp(x - m) on class cols, exp(-x) on conf cols.
    exp_arg = jnp.where(is_cls, raw - m_row, jnp.where(is_conf, -raw, 0.0))
    e = jnp.exp(exp_arg)

    # Per-group sums via one MXU matmul against the constant segment-sum matrix:
    # quat cols -> sum_a q^2 ; class cols -> softmax denominator ; else 0.
    summand = jnp.where(is_quat, raw * raw, jnp.where(is_cls, e, 0.0))
    sums = jnp.dot(summand.astype(jnp.bfloat16), seg_ref[...],
                   preferred_element_type=jnp.float32)          # (tm, P)

    denom = jnp.where(is_conf, 1.0 + e, jnp.maximum(sums, 1e-30))
    inv = pl.reciprocal(denom, approx=True)    # sigmoid + softmax denominators (EUP)
    rnorm = lax.rsqrt(jnp.maximum(sums, 1e-24))  # 1 / ||q||                    (EUP)

    # Assembly: 3 masked selects, ONE lane-dense store.  Outside the copy
    # region the masks are all false, so cols [0:ad) keep the raw logits and
    # pad cols keep the zero bias pad.
    out_ref[...] = jnp.where(is_quat, raw * rnorm,
                   jnp.where(is_cls, e * inv,
                   jnp.where(is_conf, inv, raw)))


def fused_forward(xs_flat, enc_w, enc_b, det_w_pack, det_b_pack, segsum, *,
                  anchors, num_classes, ad, tm=None):
    """xs_flat: list of [M, in_ch]. Returns (feats list [M,F], packed [M,P])
    where packed cols [0:ad) = raw logits and [ad:2ad) = activated outputs."""
    n_views = len(xs_flat)
    M, in_ch = xs_flat[0].shape
    feat_dim = enc_w.shape[1]
    det_in, p_pack = det_w_pack.shape

    if tm is None:
        tm = _choose_tm(M)
    m_pad = pl.cdiv(M, tm) * tm
    if m_pad != M:
        xs_flat = [jnp.concatenate(
            [x, jnp.zeros((m_pad - M, in_ch), x.dtype)], axis=0) for x in xs_flat]

    kernel = functools.partial(
        _fused_kernel, n_views=n_views, in_ch=in_ch, feat_dim=feat_dim,
        anchors=anchors, num_classes=num_classes, ad=ad, p_pack=p_pack)

    in_specs = (
        [pl.BlockSpec((tm, in_ch), lambda i: (i, 0)) for _ in range(n_views)]
        + [pl.BlockSpec((in_ch, feat_dim), lambda i: (0, 0)),
           pl.BlockSpec((1, feat_dim), lambda i: (0, 0)),
           pl.BlockSpec((det_in, p_pack), lambda i: (0, 0)),
           pl.BlockSpec((1, p_pack), lambda i: (0, 0)),
           pl.BlockSpec((p_pack, p_pack), lambda i: (0, 0))])
    out_specs = tuple(
        [pl.BlockSpec((tm, feat_dim), lambda i: (i, 0)) for _ in range(n_views)]
        + [pl.BlockSpec((tm, p_pack), lambda i: (i, 0))])
    out_shape = tuple(
        [jax.ShapeDtypeStruct((m_pad, feat_dim), jnp.float32) for _ in range(n_views)]
        + [jax.ShapeDtypeStruct((m_pad, p_pack), jnp.float32)])

    outs = pl.pallas_call(
        kernel,
        out_shape=out_shape,
        grid_spec=pltpu.PrefetchScalarGridSpec(
            num_scalar_prefetch=0,
            grid=(m_pad // tm,),
            in_specs=in_specs,
            out_specs=out_specs),
        compiler_params=pltpu.CompilerParams(
            dimension_semantics=("parallel",)),
    )(*xs_flat, enc_w, enc_b, det_w_pack, det_b_pack, segsum)

    if m_pad != M:
        outs = tuple(o[:M] for o in outs)
    feats = list(outs[:n_views])
    packed = outs[n_views]
    return feats, packed


# ----------------------------------------------------------------------------
# PoseEstimator (forward only)
# ----------------------------------------------------------------------------
class PoseEstimatorPallas:
    def __init__(self, sensory_channels, n_views=1, obj_ids=(1, 2, 3, 4),
                 anchors=3, key=jax.random.PRNGKey(42)):
        self.out_dim = OUT_DIM
        self.anchors = anchors
        self.obj_ids = sorted(list(obj_ids))
        self.num_classes = len(self.obj_ids)
        self.n_views = n_views
        modality = list(sensory_channels.keys())[0]
        in_ch = sensory_channels[modality]
        det_in = self.out_dim * n_views
        det_out = anchors * (4 + 3 + 1 + self.num_classes)     # A * D
        p_pack = _round_up(2 * det_out, _LANES)                 # raw + act in one slab
        self.det_out = det_out
        self.p_pack = p_pack

        k1, k2, k3, k4, k5, k6 = jax.random.split(key, 6)
        s_enc = 1.0 / jnp.sqrt(in_ch)
        s_det = 1.0 / jnp.sqrt(det_in)
        s_bb = 1.0 / jnp.sqrt(self.out_dim)

        # encoder: 1x1 conv in_ch -> out_dim  (simplified ResNetFeatureEncoder)
        self.enc_w = jax.random.uniform(k1, (in_ch, self.out_dim), jnp.float32,
                                        -s_enc, s_enc)
        self.enc_b = jax.random.uniform(k2, (1, self.out_dim), jnp.float32,
                                        -s_enc, s_enc)

        # det_head: 1x1 conv det_in -> A*(8+C), bf16 weights, zero-padded to a
        # multiple of 128 output columns AND duplicated into cols [AD:2AD) so
        # the MXU emits the activation copy region for free (one packed store).
        det_w = jax.random.uniform(k3, (det_in, det_out), jnp.float32, -s_det, s_det)
        det_b = jax.random.uniform(k4, (det_out,), jnp.float32, -s_det, s_det)
        w_bf = det_w.astype(jnp.bfloat16)
        self.det_w_pack = (jnp.zeros((det_in, p_pack), jnp.bfloat16)
                           .at[:, :det_out].set(w_bf)
                           .at[:, det_out:2 * det_out].set(w_bf))
        self.det_b_pack = (jnp.zeros((1, p_pack), jnp.float32)
                           .at[0, :det_out].set(det_b)
                           .at[0, det_out:2 * det_out].set(det_b))

        # constant block-diagonal segment-sum matrix for the in-kernel MXU reduce
        self.segsum = _build_segsum(anchors, self.num_classes, det_out, p_pack)

        # bbox_head exists in __init__ (only used by the loss path)
        self.bbox_w = jax.random.uniform(k5, (self.out_dim, 4), jnp.float32, -s_bb, s_bb)
        self.bbox_b = jax.random.uniform(k6, (4,), jnp.float32, -s_bb, s_bb)

    def forward(self, x_views, K_list=None, extrinsics=None, top_k=100,
                channels_last=False):
        A = self.anchors
        D = 8 + self.num_classes
        AD = A * D

        xs_flat = []
        B = H = W = None
        for x in x_views:                      # x: NCHW [B, C, H, W]
            B, C, H, W = x.shape
            xs_flat.append(jnp.transpose(x, (0, 2, 3, 1)).reshape(B * H * W, C))

        # one fused Pallas kernel: encoder -> concat -> det head -> activations
        feats_flat, packed = fused_forward(
            xs_flat, self.enc_w, self.enc_b, self.det_w_pack, self.det_b_pack,
            self.segsum, anchors=A, num_classes=self.num_classes, ad=AD)

        raw = packed[:, :AD]                                   # [B*H*W, A*D]
        act = packed[:, AD:2 * AD].reshape(B, H * W * A, D)    # [B, HWA, D]

        quat = act[..., 0:4]                                   # [B, HWA, 4]
        trans = act[..., 4:7]                                  # [B, HWA, 3]
        conf = act[..., 7]                                     # [B, HWA]
        class_scores = act[..., 8:]                            # [B, HWA, C]

        # decode_poses: top_k detections by confidence (plain-JAX glue)
        k = min(top_k, conf.shape[-1])
        top_conf, idx = lax.top_k(conf, k)                     # [B, k]
        det_quat = jnp.take_along_axis(quat, idx[..., None], axis=1)
        det_trans = jnp.take_along_axis(trans, idx[..., None], axis=1)
        det_cls_scores = jnp.take_along_axis(class_scores, idx[..., None], axis=1)
        det_class_idx = jnp.argmax(det_cls_scores, axis=-1)
        obj_id_table = jnp.asarray(self.obj_ids, dtype=jnp.int32)
        det_obj_ids = obj_id_table[det_class_idx]

        detections = {
            "quat": det_quat,                 # [B, k, 4]
            "trans": det_trans,               # [B, k, 3]
            "conf": top_conf,                 # [B, k]
            "class_scores": det_cls_scores,   # [B, k, num_classes]
            "obj_ids": det_obj_ids,           # [B, k]
        }

        if channels_last:
            # skip the full-tensor NHWC->NCHW transposes (perf option)
            raw_out = raw.reshape(B, H, W, AD)
            feats_out = [f.reshape(B, H, W, self.out_dim) for f in feats_flat]
        else:
            # PyTorch NCHW convention (reference semantics)
            raw_out = jnp.transpose(raw.reshape(B, H, W, AD), (0, 3, 1, 2))
            feats_out = [
                jnp.transpose(f.reshape(B, H, W, self.out_dim), (0, 3, 1, 2))
                for f in feats_flat
            ]
        return detections, raw_out, feats_out


# ----------------------------------------------------------------------------
if __name__ == "__main__":
    key = jax.random.PRNGKey(0)
    B, C, H, W = 2, 4, 16, 16            # small shapes; n_views = 1
    x = jax.random.normal(key, (B, C, H, W), dtype=jnp.float32)

    model = PoseEstimatorPallas(
        sensory_channels={"rgb": C}, n_views=1,
        obj_ids=(1, 2, 3, 4), anchors=3,
        key=jax.random.PRNGKey(42))

    detections, raw_outputs, feats = model.forward(
        [x], K_list=None, extrinsics=None, top_k=100)

    jax.block_until_ready(detections["quat"])
    jax.block_until_ready(detections["trans"])
    jax.block_until_ready(detections["conf"])
    jax.block_until_ready(raw_outputs)
    jax.block_until_ready(feats[0])

    A, D = 3, 8 + 4
    assert detections["quat"].shape == (B, 100, 4)
    assert detections["trans"].shape == (B, 100, 3)
    assert detections["conf"].shape == (B, 100)
    assert detections["class_scores"].shape == (B, 100, 4)
    assert raw_outputs.shape == (B, A * D, H, W)
    assert feats[0].shape == (B, 128, H, W)
    assert bool(jnp.all(jnp.isfinite(detections["quat"])))
    assert bool(jnp.all(jnp.isfinite(detections["conf"])))
    # quaternions L2-normalized, confidences in (0,1), class probs ~sum to 1
    qn = jnp.linalg.norm(detections["quat"], axis=-1)
    assert bool(jnp.all(jnp.abs(qn - 1.0) < 1e-2))
    assert bool(jnp.all((detections["conf"] > 0.0) & (detections["conf"] < 1.0)))
    ps = jnp.sum(detections["class_scores"], axis=-1)
    assert bool(jnp.all(jnp.abs(ps - 1.0) < 5e-2))
    print("KERNEL_OK")
</pallas_src>

<mosaic_0001>
module attributes {stable_mosaic.version = 11 : i64} {
  func.func @_fused_kernel(%arg0: i32, %arg1: memref<128x4xf32, #tpu.memory_space<vmem>>, %arg2: memref<4x128xf32, #tpu.memory_space<vmem>>, %arg3: memref<1x128xf32, #tpu.memory_space<vmem>>, %arg4: memref<128x128xbf16, #tpu.memory_space<vmem>>, %arg5: memref<1x128xf32, #tpu.memory_space<vmem>>, %arg6: memref<128x128xbf16, #tpu.memory_space<vmem>>, %arg7: memref<128x128xf32, #tpu.memory_space<vmem>>, %arg8: memref<128x128xf32, #tpu.memory_space<vmem>>) attributes {dimension_semantics = [#tpu.dimension_semantics<parallel>], iteration_bounds = array<i64: 4>, scalar_prefetch = 0 : i64, scratch_operands = 0 : i64, tpu.core_type = #tpu.core_type<tc>, window_params = [{transform_indices = @transform_0, window_bounds = array<i64: 128, 4>}, {pipeline_mode = #tpu.pipeline_mode<synchronous>, transform_indices = @transform_1, window_bounds = array<i64: 4, 128>}, {pipeline_mode = #tpu.pipeline_mode<synchronous>, transform_indices = @transform_2, window_bounds = array<i64: 1, 128>}, {pipeline_mode = #tpu.pipeline_mode<synchronous>, transform_indices = @transform_3, window_bounds = array<i64: 128, 128>}, {pipeline_mode = #tpu.pipeline_mode<synchronous>, transform_indices = @transform_4, window_bounds = array<i64: 1, 128>}, {pipeline_mode = #tpu.pipeline_mode<synchronous>, transform_indices = @transform_5, window_bounds = array<i64: 128, 128>}, {transform_indices = @transform_6, window_bounds = array<i64: 128, 128>}, {transform_indices = @transform_7, window_bounds = array<i64: 128, 128>}]} {
    %c0 = arith.constant 0 : index
    %c0_0 = arith.constant 0 : index
    %0 = vector.load %arg3[%c0, %c0_0] : memref<1x128xf32, #tpu.memory_space<vmem>>, vector<1x128xf32>
    %1 = vector.shape_cast %0 : vector<1x128xf32> to vector<1x128xf32>
    %2 = vector.broadcast %1 : vector<1x128xf32> to vector<128x128xf32>
    %c0_1 = arith.constant 0 : index
    %c0_2 = arith.constant 0 : index
    %3 = vector.load %arg1[%c0_1, %c0_2] : memref<128x4xf32, #tpu.memory_space<vmem>>, vector<128x4xf32>
    %4 = vector.extract_strided_slice %3 {offsets = [0, 0], sizes = [128, 1], strides = [1, 1]} : vector<128x4xf32> to vector<128x1xf32>
    %c0_3 = arith.constant 0 : index
    %c0_4 = arith.constant 0 : index
    %5 = vector.load %arg2[%c0_3, %c0_4] : memref<4x128xf32, #tpu.memory_space<vmem>>, vector<1x128xf32>
    %6 = vector.broadcast %4 : vector<128x1xf32> to vector<128x128xf32>
    %7 = vector.broadcast %5 : vector<1x128xf32> to vector<128x128xf32>
    %8 = arith.mulf %6, %7 : vector<128x128xf32>
    %9 = arith.addf %2, %8 : vector<128x128xf32>
    %10 = vector.extract_strided_slice %3 {offsets = [0, 1], sizes = [128, 1], strides = [1, 1]} : vector<128x4xf32> to vector<128x1xf32>
    %c1 = arith.constant 1 : index
    %c0_5 = arith.constant 0 : index
    %11 = vector.load %arg2[%c1, %c0_5] : memref<4x128xf32, #tpu.memory_space<vmem>>, vector<1x128xf32>
    %12 = vector.broadcast %10 : vector<128x1xf32> to vector<128x128xf32>
    %13 = vector.broadcast %11 : vector<1x128xf32> to vector<128x128xf32>
    %14 = arith.mulf %12, %13 : vector<128x128xf32>
    %15 = arith.addf %9, %14 : vector<128x128xf32>
    %16 = vector.extract_strided_slice %3 {offsets = [0, 2], sizes = [128, 1], strides = [1, 1]} : vector<128x4xf32> to vector<128x1xf32>
    %c2 = arith.constant 2 : index
    %c0_6 = arith.constant 0 : index
    %17 = vector.load %arg2[%c2, %c0_6] : memref<4x128xf32, #tpu.memory_space<vmem>>, vector<1x128xf32>
    %18 = vector.broadcast %16 : vector<128x1xf32> to vector<128x128xf32>
    %19 = vector.broadcast %17 : vector<1x128xf32> to vector<128x128xf32>
    %20 = arith.mulf %18, %19 : vector<128x128xf32>
    %21 = arith.addf %15, %20 : vector<128x128xf32>
    %22 = vector.extract_strided_slice %3 {offsets = [0, 3], sizes = [128, 1], strides = [1, 1]} : vector<128x4xf32> to vector<128x1xf32>
    %c3 = arith.constant 3 : index
    %c0_7 = arith.constant 0 : index
    %23 = vector.load %arg2[%c3, %c0_7] : memref<4x128xf32, #tpu.memory_space<vmem>>, vector<1x128xf32>
    %24 = vector.broadcast %22 : vector<128x1xf32> to vector<128x128xf32>
    %25 = vector.broadcast %23 : vector<1x128xf32> to vector<128x128xf32>
    %26 = arith.mulf %24, %25 : vector<128x128xf32>
    %27 = arith.addf %21, %26 : vector<128x128xf32>
    %cst = arith.constant 0.000000e+00 : f32
    %28 = vector.broadcast %cst : f32 to vector<128x128xf32>
    %29 = arith.maximumf %27, %28 : vector<128x128xf32>
    %c0_8 = arith.constant 0 : index
    %c0_9 = arith.constant 0 : index
    %30 = vector.load %arg7[%c0_8, %c0_9] : memref<128x128xf32, #tpu.memory_space<vmem>>, vector<128x128xf32>
    tpu.vector_store %arg7[%c0_8, %c0_9], %29 {strides = array<i32>} : memref<128x128xf32, #tpu.memory_space<vmem>>, vector<128x128xf32>,
    %31 = arith.truncf %29 : vector<128x128xf32> to vector<128x128xbf16>
    %c0_10 = arith.constant 0 : index
    %c0_11 = arith.constant 0 : index
    %32 = vector.load %arg4[%c0_10, %c0_11] : memref<128x128xbf16, #tpu.memory_space<vmem>>, vector<128x128xbf16>
    %cst_12 = arith.constant dense<0.000000e+00> : vector<128x128xf32>
    %33 = tpu.matmul %31, %32, %cst_12 {dimension_numbers = #tpu.dot_dimension_numbers<[1], [0], [0], [1], [0, 0, 1, 1], [], []>} : vector<128x128xbf16>, vector<128x128xbf16>, vector<128x128xf32> -> vector<128x128xf32>
    %c0_13 = arith.constant 0 : index
    %c0_14 = arith.constant 0 : index
    %34 = vector.load %arg5[%c0_13, %c0_14] : memref<1x128xf32, #tpu.memory_space<vmem>>, vector<1x128xf32>
    %35 = vector.broadcast %34 : vector<1x128xf32> to vector<128x128xf32>
    %36 = arith.addf %33, %35 : vector<128x128xf32>
    %37 = tpu.iota {dimensions = array<i32: 1>} : vector<1x128xi32>
    %c36_i32 = arith.constant 36 : i32
    %38 = vector.broadcast %c36_i32 : i32 to vector<1x128xi32>
    %39 = arith.cmpi sge, %37, %38 : vector<1x128xi32>
    %c40_i32 = arith.constant 40 : i32
    %40 = vector.broadcast %c40_i32 : i32 to vector<1x128xi32>
    %41 = arith.cmpi slt, %37, %40 : vector<1x128xi32>
    %42 = arith.andi %39, %41 : vector<1x128xi1>
    %c43_i32 = arith.constant 43 : i32
    %43 = vector.broadcast %c43_i32 : i32 to vector<1x128xi32>
    %44 = arith.cmpi eq, %37, %43 : vector<1x128xi32>
    %c44_i32 = arith.constant 44 : i32
    %45 = vector.broadcast %c44_i32 : i32 to vector<1x128xi32>
    %46 = arith.cmpi sge, %37, %45 : vector<1x128xi32>
    %c48_i32 = arith.constant 48 : i32
    %47 = vector.broadcast %c48_i32 : i32 to vector<1x128xi32>
    %48 = arith.cmpi slt, %37, %47 : vector<1x128xi32>
    %49 = arith.andi %46, %48 : vector<1x128xi1>
    %c48_i32_15 = arith.constant 48 : i32
    %50 = vector.broadcast %c48_i32_15 : i32 to vector<1x128xi32>
    %51 = arith.cmpi sge, %37, %50 : vector<1x128xi32>
    %c52_i32 = arith.constant 52 : i32
    %52 = vector.broadcast %c52_i32 : i32 to vector<1x128xi32>
    %53 = arith.cmpi slt, %37, %52 : vector<1x128xi32>
    %54 = arith.andi %51, %53 : vector<1x128xi1>
    %c55_i32 = arith.constant 55 : i32
    %55 = vector.broadcast %c55_i32 : i32 to vector<1x128xi32>
    %56 = arith.cmpi eq, %37, %55 : vector<1x128xi32>
    %c56_i32 = arith.constant 56 : i32
    %57 = vector.broadcast %c56_i32 : i32 to vector<1x128xi32>
    %58 = arith.cmpi sge, %37, %57 : vector<1x128xi32>
    %c60_i32 = arith.constant 60 : i32
    %59 = vector.broadcast %c60_i32 : i32 to vector<1x128xi32>
    %60 = arith.cmpi slt, %37, %59 : vector<1x128xi32>
    %61 = arith.andi %58, %60 : vector<1x128xi1>
    %62 = arith.ori %42, %54 : vector<1x128xi1>
    %63 = arith.ori %44, %56 : vector<1x128xi1>
    %64 = arith.ori %49, %61 : vector<1x128xi1>
    %c60_i32_16 = arith.constant 60 : i32
    %65 = vector.broadcast %c60_i32_16 : i32 to vector<1x128xi32>
    %66 = arith.cmpi sge, %37, %65 : vector<1x128xi32>
    %c64_i32 = arith.constant 64 : i32
    %67 = vector.broadcast %c64_i32 : i32 to vector<1x128xi32>
    %68 = arith.cmpi slt, %37, %67 : vector<1x128xi32>
    %69 = arith.andi %66, %68 : vector<1x128xi1>
    %c67_i32 = arith.constant 67 : i32
    %70 = vector.broadcast %c67_i32 : i32 to vector<1x128xi32>
    %71 = arith.cmpi eq, %37, %70 : vector<1x128xi32>
    %c68_i32 = arith.constant 68 : i32
    %72 = vector.broadcast %c68_i32 : i32 to vector<1x128xi32>
    %73 = arith.cmpi sge, %37, %72 : vector<1x128xi32>
    %c72_i32 = arith.constant 72 : i32
    %74 = vector.broadcast %c72_i32 : i32 to vector<1x128xi32>
    %75 = arith.cmpi slt, %37, %74 : vector<1x128xi32>
    %76 = arith.andi %73, %75 : vector<1x128xi1>
    %77 = arith.ori %62, %69 : vector<1x128xi1>
    %78 = arith.ori %63, %71 : vector<1x128xi1>
    %79 = arith.ori %64, %76 : vector<1x128xi1>
    %cst_17 = arith.constant -1.000000e+30 : f32
    %80 = vector.shape_cast %79 : vector<1x128xi1> to vector<1x128xi1>
    %81 = vector.broadcast %80 : vector<1x128xi1> to vector<128x128xi1>
    %82 = vector.broadcast %cst_17 : f32 to vector<128x128xf32>
    %83 = arith.select %81, %36, %82 : vector<128x128xi1>, vector<128x128xf32>
    %cst_18 = arith.constant dense<0xFF800000> : vector<128xf32>
    %84 = vector.multi_reduction <maximumf>, %83, %cst_18 [1] : vector<128x128xf32> to vector<128xf32>
    %85 = vector.shape_cast %84 : vector<128xf32> to vector<128x1xf32>
    %86 = vector.broadcast %85 : vector<128x1xf32> to vector<128x128xf32>
    %87 = arith.subf %36, %86 : vector<128x128xf32>
    %cst_19 = arith.constant 0.000000e+00 : f32
    %88 = vector.broadcast %cst_19 : f32 to vector<128x128xf32>
    %89 = arith.subf %88, %36 : vector<128x128xf32>
    %cst_20 = arith.constant 0.000000e+00 : f32
    %90 = vector.shape_cast %78 : vector<1x128xi1> to vector<1x128xi1>
    %91 = vector.broadcast %90 : vector<1x128xi1> to vector<128x128xi1>
    %92 = vector.broadcast %cst_20 : f32 to vector<128x128xf32>
    %93 = arith.select %91, %89, %92 : vector<128x128xi1>, vector<128x128xf32>
    %94 = vector.shape_cast %79 : vector<1x128xi1> to vector<1x128xi1>
    %95 = vector.broadcast %94 : vector<1x128xi1> to vector<128x128xi1>
    %96 = arith.select %95, %87, %93 : vector<128x128xi1>, vector<128x128xf32>
    %97 = math.exp %96 : vector<128x128xf32>
    %98 = arith.mulf %36, %36 : vector<128x128xf32>
    %cst_21 = arith.constant 0.000000e+00 : f32
    %99 = vector.shape_cast %79 : vector<1x128xi1> to vector<1x128xi1>
    %100 = vector.broadcast %99 : vector<1x128xi1> to vector<128x128xi1>
    %101 = vector.broadcast %cst_21 : f32 to vector<128x128xf32>
    %102 = arith.select %100, %97, %101 : vector<128x128xi1>, vector<128x128xf32>
    %103 = vector.shape_cast %77 : vector<1x128xi1> to vector<1x128xi1>
    %104 = vector.broadcast %103 : vector<1x128xi1> to vector<128x128xi1>
    %105 = arith.select %104, %98, %102 : vector<128x128xi1>, vector<128x128xf32>
    %106 = arith.truncf %105 : vector<128x128xf32> to vector<128x128xbf16>
    %c0_22 = arith.constant 0 : index
    %c0_23 = arith.constant 0 : index
    %107 = vector.load %arg6[%c0_22, %c0_23] : memref<128x128xbf16, #tpu.memory_space<vmem>>, vector<128x128xbf16>
    %cst_24 = arith.constant dense<0.000000e+00> : vector<128x128xf32>
    %108 = tpu.matmul %106, %107, %cst_24 {dimension_numbers = #tpu.dot_dimension_numbers<[1], [0], [0], [1], [0, 0, 1, 1], [], []>} : vector<128x128xbf16>, vector<128x128xbf16>, vector<128x128xf32> -> vector<128x128xf32>
    %cst_25 = arith.constant 1.000000e+00 : f32
    %109 = vector.broadcast %cst_25 : f32 to vector<128x128xf32>
    %110 = arith.addf %109, %97 : vector<128x128xf32>
    %cst_26 = arith.constant 1.000000e-30 : f32
    %111 = vector.broadcast %cst_26 : f32 to vector<128x128xf32>
    %112 = arith.maximumf %108, %111 : vector<128x128xf32>
    %113 = vector.shape_cast %78 : vector<1x128xi1> to vector<1x128xi1>
    %114 = vector.broadcast %113 : vector<1x128xi1> to vector<128x128xi1>
    %115 = arith.select %114, %110, %112 : vector<128x128xi1>, vector<128x128xf32>
    %116 = tpu.reciprocal %115 {approx = true} : vector<128x128xf32> -> vector<128x128xf32>
    %cst_27 = arith.constant 1.000000e-24 : f32
    %117 = vector.broadcast %cst_27 : f32 to vector<128x128xf32>
    %118 = arith.maximumf %108, %117 : vector<128x128xf32>
    %119 = math.rsqrt %118 : vector<128x128xf32>
    %120 = arith.mulf %36, %119 : vector<128x128xf32>
    %121 = arith.mulf %97, %116 : vector<128x128xf32>
    %122 = vector.shape_cast %78 : vector<1x128xi1> to vector<1x128xi1>
    %123 = vector.broadcast %122 : vector<1x128xi1> to vector<128x128xi1>
    %124 = arith.select %123, %116, %36 : vector<128x128xi1>, vector<128x128xf32>
    %125 = vector.shape_cast %79 : vector<1x128xi1> to vector<1x128xi1>
    %126 = vector.broadcast %125 : vector<1x128xi1> to vector<128x128xi1>
    %127 = arith.select %126, %121, %124 : vector<128x128xi1>, vector<128x128xf32>
    %128 = vector.shape_cast %77 : vector<1x128xi1> to vector<1x128xi1>
    %129 = vector.broadcast %128 : vector<1x128xi1> to vector<128x128xi1>
    %130 = arith.select %129, %120, %127 : vector<128x128xi1>, vector<128x128xf32>
    %c0_28 = arith.constant 0 : index
    %c0_29 = arith.constant 0 : index
    %131 = vector.load %arg8[%c0_28, %c0_29] : memref<128x128xf32, #tpu.memory_space<vmem>>, vector<128x128xf32>
    tpu.vector_store %arg8[%c0_28, %c0_29], %130 {strides = array<i32>} : memref<128x128xf32, #tpu.memory_space<vmem>>, vector<128x128xf32>,
    return
  }
  func.func @transform_0(%arg0: i32) -> (i32, i32) {
    %c0_i32 = arith.constant 0 : i32
    %c0_i32_0 = arith.constant 0 : i32
    return %arg0, %c0_i32 : i32, i32
  }
  func.func @transform_1(%arg0: i32) -> (i32, i32) {
    %c0_i32 = arith.constant 0 : i32
    %c0_i32_0 = arith.constant 0 : i32
    %c0_i32_1 = arith.constant 0 : i32
    return %c0_i32, %c0_i32_0 : i32, i32
  }
  func.func @transform_2(%arg0: i32) -> (i32, i32) {
    %c0_i32 = arith.constant 0 : i32
    %c0_i32_0 = arith.constant 0 : i32
    %c0_i32_1 = arith.constant 0 : i32
    return %c0_i32, %c0_i32_0 : i32, i32
  }
  func.func @transform_3(%arg0: i32) -> (i32, i32) {
    %c0_i32 = arith.constant 0 : i32
    %c0_i32_0 = arith.constant 0 : i32
    %c0_i32_1 = arith.constant 0 : i32
    return %c0_i32, %c0_i32_0 : i32, i32
  }
  func.func @transform_4(%arg0: i32) -> (i32, i32) {
    %c0_i32 = arith.constant 0 : i32
    %c0_i32_0 = arith.constant 0 : i32
    %c0_i32_1 = arith.constant 0 : i32
    return %c0_i32, %c0_i32_0 : i32, i32
  }
  func.func @transform_5(%arg0: i32) -> (i32, i32) {
    %c0_i32 = arith.constant 0 : i32
    %c0_i32_0 = arith.constant 0 : i32
    %c0_i32_1 = arith.constant 0 : i32
    return %c0_i32, %c0_i32_0 : i32, i32
  }
  func.func @transform_6(%arg0: i32) -> (i32, i32) {
    %c0_i32 = arith.constant 0 : i32
    %c0_i32_0 = arith.constant 0 : i32
    return %arg0, %c0_i32 : i32, i32
  }
  func.func @transform_7(%arg0: i32) -> (i32, i32) {
    %c0_i32 = arith.constant 0 : i32
    %c0_i32_0 = arith.constant 0 : i32
    return %arg0, %c0_i32 : i32, i32
  }
}

</mosaic_0001>

<llo_original>
// kernel: tpu_custom_call.1
$region0: #{tpu_custom_call.1}
  #allocation0 [shape = 'u32[]', space=smem, size = 0x4, offset = 0x4, fixed_abs, tag = 'smem constant byte address 0x4 - core index']
  #allocation1 [shape = 'u32[144,128]{1,0:T(1,128)}', space=vmem, size = 0x12000, scoped, tag = 'internal scratch']
  %s0 = inlined_call_operand.vmem [shape: f32[512,4], index: 0, kind: input, shape index: {}]
  %s1 = inlined_call_operand.vmem [shape: f32[4,128], index: 1, kind: input, shape index: {}]
  %s2 = inlined_call_operand.vmem [shape: f32[1,128], index: 2, kind: input, shape index: {}]
  %s3 = inlined_call_operand.vmem [shape: bf16[128,128], index: 3, kind: input, shape index: {}]
  %s4 = inlined_call_operand.vmem [shape: f32[1,128], index: 4, kind: input, shape index: {}]
  %s5 = inlined_call_operand.vmem [shape: bf16[128,128], index: 5, kind: input, shape index: {}]
  %s6 = inlined_call_operand.hbm [shape: f32[512,128], index: 6, kind: output, shape index: {0}]
  %s7 = inlined_call_operand.hbm [shape: f32[512,128], index: 7, kind: output, shape index: {1}]
  %8 = xla_tuple %s6, %s7
  %s9 = sld [smem:[#allocation0]]
  $region65: #{tpu_custom_call.1} parent=0
    _
  %s11 = ssub.s32 1, %s9
  %s12 = scalar_select 0, %s11, %s9
  $region1: #{tpu_custom_call.1} parent=0
    #allocation2 [shape = 'u8[131072]{0}', space=vmem, size = 0x20000, scoped, tag = 'output window, operand 0']
    #allocation3 [shape = 's32[2]{0}', space=sflag, size = 0x8, scoped, tag = 'scoped memory for tpu_custom_call.1']
    #allocation4 [shape = 'u8[131072]{0}', space=vmem, size = 0x20000, scoped, tag = 'output window, operand 1']
    #allocation5 [shape = 's32[2]{0}', space=sflag, size = 0x8, scoped, tag = 'scoped memory for tpu_custom_call.1']
    %13 = vsyncpa [#allocation3], 0
    %s14 = scalar_lea.sflag [#allocation3], 1
    %15 = vsyncpa %s14, 0
    %16 = vsyncpa [#allocation5], 0
    %s17 = scalar_lea.sflag [#allocation5], 1
    %18 = vsyncpa %s17, 0
    loop: start=0, step=1, limit=6
    $region2: #{tpu_custom_call.1} parent=1 // loop_pre_header
      _
    $region3: #{tpu_custom_call.1} parent=1 // loop_header
      %s20 = sphi 0, %s24
      %p21 = scmp.ge.s32.totalorder %s20, 6
      %s30 = sphi 0, %s32
      %s33 = sphi 0, %s30
      %s34 = sphi 0, %s33
      %s50 = sphi 0, %s34
      %s54 = sphi 0, %s54
      %s56 = sphi 0, %s54
      %s57 = sphi 0, %s56
      %s71 = sphi 0, %s57
      %s75 = sphi 0, %s75
      %s77 = sphi 0, %s75
      %s78 = sphi 0, %s77
      %s92 = sphi 0, %s78
      %s96 = sphi 0, %s96
      %s98 = sphi 0, %s96
      %s99 = sphi 0, %s98
      %s113 = sphi 0, %s99
      %s117 = sphi 0, %s117
      %s119 = sphi 0, %s117
      %s120 = sphi 0, %s119
      %s134 = sphi 0, %s120
      %s138 = sphi 0, %s138
      %s140 = sphi 0, %s138
      %s141 = sphi 0, %s140
      %s155 = sphi 0, %s141
      %s161 = sphi 0, %s163
      %s164 = sphi 0, %s161
      %s165 = sphi 0, %s164
      %s181 = sphi 0, %s165
      %s187 = sphi 0, %s189
      %s190 = sphi 0, %s187
      %s191 = sphi 0, %s190
      %s207 = sphi 0, %s191
    $region4: #{tpu_custom_call.1} parent=1 // loop_header_branch
      %23 = sbr.rel (%p21) target = $region8
    $region5: #{tpu_custom_call.1} parent=1 // loop_body
      %s25 = ssub.s32 %s20, 1
      %s26 = ssub.s32 %s20, 2
      %s27 = sadd.s32 %s20, 1
      %s28 = ssub.s32 %s20, %s27
      %p29 = scmp.eq.s32.totalorder %s28, 0
      %s31 = sadd.s32 %s30, 1
      %s32 = scalar_select %p29, %s30, %s31
      %p35 = pneg %p29
      %p36 = scmp.eq.s32.totalorder %s20, 3
      %p37 = por %p35, %p36
      %p38 = scmp.ne.s32.totalorder %s30, %s33
      %p39 = scmp.eq.s32.totalorder %s20, 0
      %p40 = por %p38, %p39
      %p41 = scmp.ne.s32.totalorder %s30, %s33
      %p42 = scmp.eq.s32.totalorder %s25, 3
      %p43 = por %p41, %p42
      %p44 = scmp.ne.s32.totalorder %s33, %s34
      %p45 = scmp.eq.s32.totalorder %s25, 0
      %p46 = por %p44, %p45
      %p47 = scmp.ne.s32.totalorder %s33, %s34
      %p48 = scmp.eq.s32.totalorder %s26, 3
      %p49 = por %p47, %p48
      %p51 = scmp.ne.s32.totalorder %s34, %s50
      %p52 = scmp.eq.s32.totalorder %s26, 0
      %p53 = por %p51, %p52
      %s55 = sadd.s32 %s54, 1
      %p58 = scmp.eq.s32.totalorder %s20, 3
      %p59 = scmp.ne.s32.totalorder %s54, %s56
      %p60 = scmp.eq.s32.totalorder %s20, 0
      %p61 = por %p59, %p60
      %p62 = scmp.ne.s32.totalorder %s54, %s56
      %p63 = scmp.eq.s32.totalorder %s25, 3
      %p64 = por %p62, %p63
      %p65 = scmp.ne.s32.totalorder %s56, %s57
      %p66 = scmp.eq.s32.totalorder %s25, 0
      %p67 = por %p65, %p66
      %p68 = scmp.ne.s32.totalorder %s56, %s57
      %p69 = scmp.eq.s32.totalorder %s26, 3
      %p70 = por %p68, %p69
      %p72 = scmp.ne.s32.totalorder %s57, %s71
      %p73 = scmp.eq.s32.totalorder %s26, 0
      %p74 = por %p72, %p73
      %s76 = sadd.s32 %s75, 1
      %p79 = scmp.eq.s32.totalorder %s20, 3
      %p80 = scmp.ne.s32.totalorder %s75, %s77
      %p81 = scmp.eq.s32.totalorder %s20, 0
      %p82 = por %p80, %p81
      %p83 = scmp.ne.s32.totalorder %s75, %s77
      %p84 = scmp.eq.s32.totalorder %s25, 3
      %p85 = por %p83, %p84
      %p86 = scmp.ne.s32.totalorder %s77, %s78
      %p87 = scmp.eq.s32.totalorder %s25, 0
      %p88 = por %p86, %p87
      %p89 = scmp.ne.s32.totalorder %s77, %s78
      %p90 = scmp.eq.s32.totalorder %s26, 3
      %p91 = por %p89, %p90
      %p93 = scmp.ne.s32.totalorder %s78, %s92
      %p94 = scmp.eq.s32.totalorder %s26, 0
      %p95 = por %p93, %p94
      %s97 = sadd.s32 %s96, 1
      %p100 = scmp.eq.s32.totalorder %s20, 3
      %p101 = scmp.ne.s32.totalorder %s96, %s98
      %p102 = scmp.eq.s32.totalorder %s20, 0
      %p103 = por %p101, %p102
      %p104 = scmp.ne.s32.totalorder %s96, %s98
      %p105 = scmp.eq.s32.totalorder %s25, 3
      %p106 = por %p104, %p105
      %p107 = scmp.ne.s32.totalorder %s98, %s99
      %p108 = scmp.eq.s32.totalorder %s25, 0
      %p109 = por %p107, %p108
      %p110 = scmp.ne.s32.totalorder %s98, %s99
      %p111 = scmp.eq.s32.totalorder %s26, 3
      %p112 = por %p110, %p111
      %p114 = scmp.ne.s32.totalorder %s99, %s113
      %p115 = scmp.eq.s32.totalorder %s26, 0
      %p116 = por %p114, %p115
      %s118 = sadd.s32 %s117, 1
      %p121 = scmp.eq.s32.totalorder %s20, 3
      %p122 = scmp.ne.s32.totalorder %s117, %s119
      %p123 = scmp.eq.s32.totalorder %s20, 0
      %p124 = por %p122, %p123
      %p125 = scmp.ne.s32.totalorder %s117, %s119
      %p126 = scmp.eq.s32.totalorder %s25, 3
      %p127 = por %p125, %p126
      %p128 = scmp.ne.s32.totalorder %s119, %s120
      %p129 = scmp.eq.s32.totalorder %s25, 0
      %p130 = por %p128, %p129
      %p131 = scmp.ne.s32.totalorder %s119, %s120
      %p132 = scmp.eq.s32.totalorder %s26, 3
      %p133 = por %p131, %p132
      %p135 = scmp.ne.s32.totalorder %s120, %s134
      %p136 = scmp.eq.s32.totalorder %s26, 0
      %p137 = por %p135, %p136
      %s139 = sadd.s32 %s138, 1
      %p142 = scmp.eq.s32.totalorder %s20, 3
      %p143 = scmp.ne.s32.totalorder %s138, %s140
      %p144 = scmp.eq.s32.totalorder %s20, 0
      %p145 = por %p143, %p144
      %p146 = scmp.ne.s32.totalorder %s138, %s140
      %p147 = scmp.eq.s32.totalorder %s25, 3
      %p148 = por %p146, %p147
      %p149 = scmp.ne.s32.totalorder %s140, %s141
      %p150 = scmp.eq.s32.totalorder %s25, 0
      %p151 = por %p149, %p150
      %p152 = scmp.ne.s32.totalorder %s140, %s141
      %p153 = scmp.eq.s32.totalorder %s26, 3
      %p154 = por %p152, %p153
      %p156 = scmp.ne.s32.totalorder %s141, %s155
      %p157 = scmp.eq.s32.totalorder %s26, 0
      %p158 = por %p156, %p157
      %s159 = ssub.s32 %s20, %s27
      %p160 = scmp.eq.s32.totalorder %s159, 0
      %s162 = sadd.s32 %s161, 1
      %s163 = scalar_select %p160, %s161, %s162
      %p166 = pneg %p160
      %p167 = scmp.eq.s32.totalorder %s20, 3
      %p168 = por %p166, %p167
      %p169 = scmp.ne.s32.totalorder %s161, %s164
      %p170 = scmp.eq.s32.totalorder %s20, 0
      %p171 = por %p169, %p170
      %p172 = scmp.ne.s32.totalorder %s161, %s164
      %p173 = scmp.eq.s32.totalorder %s25, 3
      %p174 = por %p172, %p173
      %p175 = scmp.ne.s32.totalorder %s164, %s165
      %p176 = scmp.eq.s32.totalorder %s25, 0
      %p177 = por %p175, %p176
      %p178 = scmp.ne.s32.totalorder %s164, %s165
      %p179 = scmp.eq.s32.totalorder %s26, 3
      %p180 = por %p178, %p179
      %p182 = scmp.ne.s32.totalorder %s165, %s181
      %p183 = scmp.eq.s32.totalorder %s26, 0
      %p184 = por %p182, %p183
      %s185 = ssub.s32 %s20, %s27
      %p186 = scmp.eq.s32.totalorder %s185, 0
      %s188 = sadd.s32 %s187, 1
      %s189 = scalar_select %p186, %s187, %s188
      %p192 = pneg %p186
      %p193 = scmp.eq.s32.totalorder %s20, 3
      %p194 = por %p192, %p193
      %p195 = scmp.ne.s32.totalorder %s187, %s190
      %p196 = scmp.eq.s32.totalorder %s20, 0
      %p197 = por %p195, %p196
      %p198 = scmp.ne.s32.totalorder %s187, %s190
      %p199 = scmp.eq.s32.totalorder %s25, 3
      %p200 = por %p198, %p199
      %p201 = scmp.ne.s32.totalorder %s190, %s191
      %p202 = scmp.eq.s32.totalorder %s25, 0
      %p203 = por %p201, %p202
      %p204 = scmp.ne.s32.totalorder %s190, %s191
      %p205 = scmp.eq.s32.totalorder %s26, 3
      %p206 = por %p204, %p205
      %p208 = scmp.ne.s32.totalorder %s191, %s207
      %p209 = scmp.eq.s32.totalorder %s26, 0
      %p210 = por %p208, %p209
      %p211 = scmp.le.s32.totalorder 1, %s20
      %p212 = scmp.lt.s32.totalorder %s20, 5
      %p213 = pnand %p211, %p212
      %p214 = pneg %p213
      // Predicated region
      $region9: #{tpu_custom_call.1} parent=5 // pred_check
        _
      $region10: #{tpu_custom_call.1} parent=5 // pred_check_branch
        %216 = sbr.rel (%p213) target = $region12
      $region11: #{tpu_custom_call.1} parent=5 // pred_region
        %s217 = ssub.s32 %s20, 1
        // Predicated region
        $region13: #{tpu_custom_call.1} parent=11 // pred_check
          %p218 = pneg %p67
        $region14: #{tpu_custom_call.1} parent=11 // pred_check_branch
          %220 = sbr.rel (%p218) target = $region16
        $region15: #{tpu_custom_call.1} parent=11 // pred_region
          _
        $region16: #{tpu_custom_call.1} parent=11 // pred_fallthru
          _
        // Predicated region
        $region17: #{tpu_custom_call.1} parent=11 // pred_check
          %p221 = pneg %p88
        $region18: #{tpu_custom_call.1} parent=11 // pred_check_branch
          %223 = sbr.rel (%p221) target = $region20
        $region19: #{tpu_custom_call.1} parent=11 // pred_region
          _
        $region20: #{tpu_custom_call.1} parent=11 // pred_fallthru
          _
        // Predicated region
        $region21: #{tpu_custom_call.1} parent=11 // pred_check
          %p224 = pneg %p109
        $region22: #{tpu_custom_call.1} parent=11 // pred_check_branch
          %226 = sbr.rel (%p224) target = $region24
        $region23: #{tpu_custom_call.1} parent=11 // pred_region
          _
        $region24: #{tpu_custom_call.1} parent=11 // pred_fallthru
          _
        // Predicated region
        $region25: #{tpu_custom_call.1} parent=11 // pred_check
          %p227 = pneg %p130
        $region26: #{tpu_custom_call.1} parent=11 // pred_check_branch
          %229 = sbr.rel (%p227) target = $region28
        $region27: #{tpu_custom_call.1} parent=11 // pred_region
          _
        $region28: #{tpu_custom_call.1} parent=11 // pred_fallthru
          _
        // Predicated region
        $region29: #{tpu_custom_call.1} parent=11 // pred_check
          %p230 = pneg %p151
        $region30: #{tpu_custom_call.1} parent=11 // pred_check_branch
          %232 = sbr.rel (%p230) target = $region32
        $region31: #{tpu_custom_call.1} parent=11 // pred_region
          _
        $region32: #{tpu_custom_call.1} parent=11 // pred_fallthru
          _
      $region12: #{tpu_custom_call.1} parent=5 // pred_fallthru
        _
      %p233 = scmp.lt.s32.totalorder %s20, 4
      // Predicated region
      $region33: #{tpu_custom_call.1} parent=5 // pred_check
        %p234 = pneg %p233
      $region34: #{tpu_custom_call.1} parent=5 // pred_check_branch
        %236 = sbr.rel (%p234) target = $region36
      $region35: #{tpu_custom_call.1} parent=5 // pred_region
        // Predicated region
        $region37: #{tpu_custom_call.1} parent=35 // pred_check
          %p237 = pneg %p40
        $region38: #{tpu_custom_call.1} parent=35 // pred_check_branch
          %239 = sbr.rel (%p237) target = $region40
        $region39: #{tpu_custom_call.1} parent=35 // pred_region
          %s240 = smul.u32 16, %s20
          %p241 = scmp.lt.s32.totalorder %s240, 63
          %s242 = scalar_select %p241, %s240, 63
          %s243 = smul.addr %s242, 8
          %s244 = scalar_lea.vmem %s0, %s243
          %s245 = smul.u32 16, %s20
        $region40: #{tpu_custom_call.1} parent=35 // pred_fallthru
          _
      $region36: #{tpu_custom_call.1} parent=5 // pred_fallthru
        _
      %p246 = scmp.le.s32.totalorder 1, %s20
      %p247 = scmp.lt.s32.totalorder %s20, 5
      %p248 = pnand %p246, %p247
      %p249 = pneg %p248
      // Predicated region
      $region41: #{tpu_custom_call.1} parent=5 // pred_check
        _
      $region42: #{tpu_custom_call.1} parent=5 // pred_check_branch
        %251 = sbr.rel (%p248) target = $region44
      $region43: #{tpu_custom_call.1} parent=5 // pred_region
        %s252 = ssub.s32 %s20, 1
        %s253 = smul.u32 16, %s25
        %p254 = scmp.lt.s32.totalorder %s253, 63
        %s255 = scalar_select %p254, %s253, 63
        %s256 = smul.addr %s255, 8
        %s257 = scalar_lea.vmem %s0, %s256
        %p258 = pneg %p46
        %p259 = pneg %p43
        %p260 = pneg %p67
        %p261 = pneg %p64
        %p262 = pneg %p88
        %p263 = pneg %p85
        %p264 = pneg %p109
        %p265 = pneg %p106
        %p266 = pneg %p130
        %p267 = pneg %p127
        %p268 = pneg %p151
        %p269 = pneg %p148
        %p270 = pneg %p177
        %p271 = pneg %p174
        %s272 = sand.u32 %s164, 1
        %s273 = scalar_lea.sflag [#allocation3], %s272
        %s274 = sand.u32 %s164, 1
        %s275 = smul.addr %s274, 128
        %s276 = scalar_lea.vmem [#allocation2], %s275
        %p277 = pneg %p203
        %p278 = pneg %p200
        %s279 = sand.u32 %s190, 1
        %s280 = scalar_lea.sflag [#allocation5], %s279
        %s281 = sand.u32 %s190, 1
        %s282 = smul.addr %s281, 128
        %s283 = scalar_lea.vmem [#allocation4], %s282
        %s284 = smul.u32 16, %s25
        %p285 = scmp.lt.s32.totalorder %s284, 63
        %s286 = scalar_select %p285, %s284, 63
        %s287 = smul.addr %s286, 8
        %s288 = scalar_lea.vmem %s0, %s287
        %s289 = smul.u32 16, %s25
        %s290 = smul.u32 16, %s25
        %s291 = smul.u32 16, %s25
        %v293 = vld [vmem:[%s2] sm:$0x1]
        %v295 = vlaneseq
        %v296 = vshrl.u32 %v295, 7
        %v297 = vsub.s32 0, %v296
        %v298 = vrot.slane %v293, %v297
        %v300 = vld [vmem:[%s288] sm:$0xff]
        %v301 = vld [vmem:[%s288 + $0x8] sm:$0xff]
        %v302 = vld [vmem:[%s288 + $0x10] sm:$0xff]
        %v303 = vld [vmem:[%s288 + $0x18] sm:$0xff]
        %v304 = vld [vmem:[%s288 + $0x20] sm:$0xff]
        %v305 = vld [vmem:[%s288 + $0x28] sm:$0xff]
        %v306 = vld [vmem:[%s288 + $0x30] sm:$0xff]
        %v307 = vld [vmem:[%s288 + $0x38] sm:$0xff]
        %v308 = vld [vmem:[%s288 + $0x40] sm:$0xff]
        %v309 = vld [vmem:[%s288 + $0x48] sm:$0xff]
        %v310 = vld [vmem:[%s288 + $0x50] sm:$0xff]
        %v311 = vld [vmem:[%s288 + $0x58] sm:$0xff]
        %v312 = vld [vmem:[%s288 + $0x60] sm:$0xff]
        %v313 = vld [vmem:[%s288 + $0x68] sm:$0xff]
        %v314 = vld [vmem:[%s288 + $0x70] sm:$0xff]
        %v315 = vld [vmem:[%s288 + $0x78] sm:$0xff]
        %v316 = vld [vmem:[%s1] sm:$0x1]
        %318 = vset.pattern.permute.xlu0 0
        %319 = vperm.xlu0 %318, %v300
        %v320 = vpop.permute.xlu0 %319
        %323 = vset.pattern.permute.xlu0 0
        %324 = vperm.xlu0 %323, %v301
        %v325 = vpop.permute.xlu0 %324
        %328 = vset.pattern.permute.xlu0 0
        %329 = vperm.xlu0 %328, %v302
        %v330 = vpop.permute.xlu0 %329
        %333 = vset.pattern.permute.xlu0 0
        %334 = vperm.xlu0 %333, %v303
        %v335 = vpop.permute.xlu0 %334
        %338 = vset.pattern.permute.xlu0 0
        %339 = vperm.xlu0 %338, %v304
        %v340 = vpop.permute.xlu0 %339
        %343 = vset.pattern.permute.xlu0 0
        %344 = vperm.xlu0 %343, %v305
        %v345 = vpop.permute.xlu0 %344
        %348 = vset.pattern.permute.xlu0 0
        %349 = vperm.xlu0 %348, %v306
        %v350 = vpop.permute.xlu0 %349
        %353 = vset.pattern.permute.xlu0 0
        %354 = vperm.xlu0 %353, %v307
        %v355 = vpop.permute.xlu0 %354
        %358 = vset.pattern.permute.xlu0 0
        %359 = vperm.xlu0 %358, %v308
        %v360 = vpop.permute.xlu0 %359
        %363 = vset.pattern.permute.xlu0 0
        %364 = vperm.xlu0 %363, %v309
        %v365 = vpop.permute.xlu0 %364
        %368 = vset.pattern.permute.xlu0 0
        %369 = vperm.xlu0 %368, %v310
        %v370 = vpop.permute.xlu0 %369
        %373 = vset.pattern.permute.xlu0 0
        %374 = vperm.xlu0 %373, %v311
        %v375 = vpop.permute.xlu0 %374
        %378 = vset.pattern.permute.xlu0 0
        %379 = vperm.xlu0 %378, %v312
        %v380 = vpop.permute.xlu0 %379
        %383 = vset.pattern.permute.xlu0 0
        %384 = vperm.xlu0 %383, %v313
        %v385 = vpop.permute.xlu0 %384
        %388 = vset.pattern.permute.xlu0 0
        %389 = vperm.xlu0 %388, %v314
        %v390 = vpop.permute.xlu0 %389
        %393 = vset.pattern.permute.xlu0 0
        %394 = vperm.xlu0 %393, %v315
        %v395 = vpop.permute.xlu0 %394
        %v397 = vlaneseq
        %v398 = vshrl.u32 %v397, 7
        %v399 = vsub.s32 0, %v398
        %v400 = vrot.slane %v316, %v399
        %v401 = vmul.f32 %v320, %v400
        %v402 = vmul.f32 %v325, %v400
        %v403 = vmul.f32 %v330, %v400
        %v404 = vmul.f32 %v335, %v400
        %v405 = vmul.f32 %v340, %v400
        %v406 = vmul.f32 %v345, %v400
        %v407 = vmul.f32 %v350, %v400
        %v408 = vmul.f32 %v355, %v400
        %v409 = vmul.f32 %v360, %v400
        %v410 = vmul.f32 %v365, %v400
        %v411 = vmul.f32 %v370, %v400
        %v412 = vmul.f32 %v375, %v400
        %v413 = vmul.f32 %v380, %v400
        %v414 = vmul.f32 %v385, %v400
        %v415 = vmul.f32 %v390, %v400
        %v416 = vmul.f32 %v395, %v400
        %v417 = vadd.f32 %v298, %v401
        %v418 = vadd.f32 %v298, %v402
        %v419 = vadd.f32 %v298, %v403
        %v420 = vadd.f32 %v298, %v404
        %v421 = vadd.f32 %v298, %v405
        %v422 = vadd.f32 %v298, %v406
        %v423 = vadd.f32 %v298, %v407
        %v424 = vadd.f32 %v298, %v408
        %v425 = vadd.f32 %v298, %v409
        %v426 = vadd.f32 %v298, %v410
        %v427 = vadd.f32 %v298, %v411
        %v428 = vadd.f32 %v298, %v412
        %v429 = vadd.f32 %v298, %v413
        %v430 = vadd.f32 %v298, %v414
        %v431 = vadd.f32 %v298, %v415
        %v432 = vadd.f32 %v298, %v416
        %v433 = vld [vmem:[%s1 + $0x1] sm:$0x1]
        %434 = vset.pattern.permute.xlu0 1
        %435 = vperm.xlu0 %434, %v300
        %v436 = vpop.permute.xlu0 %435
        %438 = vset.pattern.permute.xlu0 1
        %439 = vperm.xlu0 %438, %v301
        %v440 = vpop.permute.xlu0 %439
        %442 = vset.pattern.permute.xlu0 1
        %443 = vperm.xlu0 %442, %v302
        %v444 = vpop.permute.xlu0 %443
        %446 = vset.pattern.permute.xlu0 1
        %447 = vperm.xlu0 %446, %v303
        %v448 = vpop.permute.xlu0 %447
        %450 = vset.pattern.permute.xlu0 1
        %451 = vperm.xlu0 %450, %v304
        %v452 = vpop.permute.xlu0 %451
        %454 = vset.pattern.permute.xlu0 1
        %455 = vperm.xlu0 %454, %v305
        %v456 = vpop.permute.xlu0 %455
        %458 = vset.pattern.permute.xlu0 1
        %459 = vperm.xlu0 %458, %v306
        %v460 = vpop.permute.xlu0 %459
        %462 = vset.pattern.permute.xlu0 1
        %463 = vperm.xlu0 %462, %v307
        %v464 = vpop.permute.xlu0 %463
        %466 = vset.pattern.permute.xlu0 1
        %467 = vperm.xlu0 %466, %v308
        %v468 = vpop.permute.xlu0 %467
        %470 = vset.pattern.permute.xlu0 1
        %471 = vperm.xlu0 %470, %v309
        %v472 = vpop.permute.xlu0 %471
        %474 = vset.pattern.permute.xlu0 1
        %475 = vperm.xlu0 %474, %v310
        %v476 = vpop.permute.xlu0 %475
        %478 = vset.pattern.permute.xlu0 1
        %479 = vperm.xlu0 %478, %v311
        %v480 = vpop.permute.xlu0 %479
        %482 = vset.pattern.permute.xlu0 1
        %483 = vperm.xlu0 %482, %v312
        %v484 = vpop.permute.xlu0 %483
        %486 = vset.pattern.permute.xlu0 1
        %487 = vperm.xlu0 %486, %v313
        %v488 = vpop.permute.xlu0 %487
        %490 = vset.pattern.permute.xlu0 1
        %491 = vperm.xlu0 %490, %v314
        %v492 = vpop.permute.xlu0 %491
        %494 = vset.pattern.permute.xlu0 1
        %495 = vperm.xlu0 %494, %v315
        %v496 = vpop.permute.xlu0 %495
        %v498 = vlaneseq
        %v499 = vshrl.u32 %v498, 7
        %v500 = vsub.s32 0, %v499
        %v501 = vrot.slane %v433, %v500
        %v502 = vmul.f32 %v436, %v501
        %v503 = vmul.f32 %v440, %v501
        %v504 = vmul.f32 %v444, %v501
        %v505 = vmul.f32 %v448, %v501
        %v506 = vmul.f32 %v452, %v501
        %v507 = vmul.f32 %v456, %v501
        %v508 = vmul.f32 %v460, %v501
        %v509 = vmul.f32 %v464, %v501
        %v510 = vmul.f32 %v468, %v501
        %v511 = vmul.f32 %v472, %v501
        %v512 = vmul.f32 %v476, %v501
        %v513 = vmul.f32 %v480, %v501
        %v514 = vmul.f32 %v484, %v501
        %v515 = vmul.f32 %v488, %v501
        %v516 = vmul.f32 %v492, %v501
        %v517 = vmul.f32 %v496, %v501
        %v518 = vadd.f32 %v417, %v502
        %v519 = vadd.f32 %v418, %v503
        %v520 = vadd.f32 %v419, %v504
        %v521 = vadd.f32 %v420, %v505
        %v522 = vadd.f32 %v421, %v506
        %v523 = vadd.f32 %v422, %v507
        %v524 = vadd.f32 %v423, %v508
        %v525 = vadd.f32 %v424, %v509
        %v526 = vadd.f32 %v425, %v510
        %v527 = vadd.f32 %v426, %v511
        %v528 = vadd.f32 %v427, %v512
        %v529 = vadd.f32 %v428, %v513
        %v530 = vadd.f32 %v429, %v514
        %v531 = vadd.f32 %v430, %v515
        %v532 = vadd.f32 %v431, %v516
        %v533 = vadd.f32 %v432, %v517
        %v534 = vld [vmem:[%s1 + $0x2] sm:$0x1]
        %535 = vset.pattern.permute.xlu0 2
        %536 = vperm.xlu0 %535, %v300
        %v537 = vpop.permute.xlu0 %536
        %539 = vset.pattern.permute.xlu0 2
        %540 = vperm.xlu0 %539, %v301
        %v541 = vpop.permute.xlu0 %540
        %543 = vset.pattern.permute.xlu0 2
        %544 = vperm.xlu0 %543, %v302
        %v545 = vpop.permute.xlu0 %544
        %547 = vset.pattern.permute.xlu0 2
        %548 = vperm.xlu0 %547, %v303
        %v549 = vpop.permute.xlu0 %548
        %551 = vset.pattern.permute.xlu0 2
        %552 = vperm.xlu0 %551, %v304
        %v553 = vpop.permute.xlu0 %552
        %555 = vset.pattern.permute.xlu0 2
        %556 = vperm.xlu0 %555, %v305
        %v557 = vpop.permute.xlu0 %556
        %559 = vset.pattern.permute.xlu0 2
        %560 = vperm.xlu0 %559, %v306
        %v561 = vpop.permute.xlu0 %560
        %563 = vset.pattern.permute.xlu0 2
        %564 = vperm.xlu0 %563, %v307
        %v565 = vpop.permute.xlu0 %564
        %567 = vset.pattern.permute.xlu0 2
        %568 = vperm.xlu0 %567, %v308
        %v569 = vpop.permute.xlu0 %568
        %571 = vset.pattern.permute.xlu0 2
        %572 = vperm.xlu0 %571, %v309
        %v573 = vpop.permute.xlu0 %572
        %575 = vset.pattern.permute.xlu0 2
        %576 = vperm.xlu0 %575, %v310
        %v577 = vpop.permute.xlu0 %576
        %579 = vset.pattern.permute.xlu0 2
        %580 = vperm.xlu0 %579, %v311
        %v581 = vpop.permute.xlu0 %580
        %583 = vset.pattern.permute.xlu0 2
        %584 = vperm.xlu0 %583, %v312
        %v585 = vpop.permute.xlu0 %584
        %587 = vset.pattern.permute.xlu0 2
        %588 = vperm.xlu0 %587, %v313
        %v589 = vpop.permute.xlu0 %588
        %591 = vset.pattern.permute.xlu0 2
        %592 = vperm.xlu0 %591, %v314
        %v593 = vpop.permute.xlu0 %592
        %595 = vset.pattern.permute.xlu0 2
        %596 = vperm.xlu0 %595, %v315
        %v597 = vpop.permute.xlu0 %596
        %v599 = vlaneseq
        %v600 = vshrl.u32 %v599, 7
        %v601 = vsub.s32 0, %v600
        %v602 = vrot.slane %v534, %v601
        %v603 = vmul.f32 %v537, %v602
        %v604 = vmul.f32 %v541, %v602
        %v605 = vmul.f32 %v545, %v602
        %v606 = vmul.f32 %v549, %v602
        %v607 = vmul.f32 %v553, %v602
        %v608 = vmul.f32 %v557, %v602
        %v609 = vmul.f32 %v561, %v602
        %v610 = vmul.f32 %v565, %v602
        %v611 = vmul.f32 %v569, %v602
        %v612 = vmul.f32 %v573, %v602
        %v613 = vmul.f32 %v577, %v602
        %v614 = vmul.f32 %v581, %v602
        %v615 = vmul.f32 %v585, %v602
        %v616 = vmul.f32 %v589, %v602
        %v617 = vmul.f32 %v593, %v602
        %v618 = vmul.f32 %v597, %v602
        %v619 = vadd.f32 %v518, %v603
        %v620 = vadd.f32 %v519, %v604
        %v621 = vadd.f32 %v520, %v605
        %v622 = vadd.f32 %v521, %v606
        %v623 = vadd.f32 %v522, %v607
        %v624 = vadd.f32 %v523, %v608
        %v625 = vadd.f32 %v524, %v609
        %v626 = vadd.f32 %v525, %v610
        %v627 = vadd.f32 %v526, %v611
        %v628 = vadd.f32 %v527, %v612
        %v629 = vadd.f32 %v528, %v613
        %v630 = vadd.f32 %v529, %v614
        %v631 = vadd.f32 %v530, %v615
        %v632 = vadd.f32 %v531, %v616
        %v633 = vadd.f32 %v532, %v617
        %v634 = vadd.f32 %v533, %v618
        %v635 = vld [vmem:[%s1 + $0x3] sm:$0x1]
        %636 = vset.pattern.permute.xlu0 3
        %637 = vperm.xlu0 %636, %v300
        %v638 = vpop.permute.xlu0 %637
        %640 = vset.pattern.permute.xlu0 3
        %641 = vperm.xlu0 %640, %v301
        %v642 = vpop.permute.xlu0 %641
        %644 = vset.pattern.permute.xlu0 3
        %645 = vperm.xlu0 %644, %v302
        %v646 = vpop.permute.xlu0 %645
        %648 = vset.pattern.permute.xlu0 3
        %649 = vperm.xlu0 %648, %v303
        %v650 = vpop.permute.xlu0 %649
        %652 = vset.pattern.permute.xlu0 3
        %653 = vperm.xlu0 %652, %v304
        %v654 = vpop.permute.xlu0 %653
        %656 = vset.pattern.permute.xlu0 3
        %657 = vperm.xlu0 %656, %v305
        %v658 = vpop.permute.xlu0 %657
        %660 = vset.pattern.permute.xlu0 3
        %661 = vperm.xlu0 %660, %v306
        %v662 = vpop.permute.xlu0 %661
        %664 = vset.pattern.permute.xlu0 3
        %665 = vperm.xlu0 %664, %v307
        %v666 = vpop.permute.xlu0 %665
        %668 = vset.pattern.permute.xlu0 3
        %669 = vperm.xlu0 %668, %v308
        %v670 = vpop.permute.xlu0 %669
        %672 = vset.pattern.permute.xlu0 3
        %673 = vperm.xlu0 %672, %v309
        %v674 = vpop.permute.xlu0 %673
        %676 = vset.pattern.permute.xlu0 3
        %677 = vperm.xlu0 %676, %v310
        %v678 = vpop.permute.xlu0 %677
        %680 = vset.pattern.permute.xlu0 3
        %681 = vperm.xlu0 %680, %v311
        %v682 = vpop.permute.xlu0 %681
        %684 = vset.pattern.permute.xlu0 3
        %685 = vperm.xlu0 %684, %v312
        %v686 = vpop.permute.xlu0 %685
        %688 = vset.pattern.permute.xlu0 3
        %689 = vperm.xlu0 %688, %v313
        %v690 = vpop.permute.xlu0 %689
        %692 = vset.pattern.permute.xlu0 3
        %693 = vperm.xlu0 %692, %v314
        %v694 = vpop.permute.xlu0 %693
        %696 = vset.pattern.permute.xlu0 3
        %697 = vperm.xlu0 %696, %v315
        %v698 = vpop.permute.xlu0 %697
        %v700 = vlaneseq
        %v701 = vshrl.u32 %v700, 7
        %v702 = vsub.s32 0, %v701
        %v703 = vrot.slane %v635, %v702
        %v704 = vmul.f32 %v638, %v703
        %v705 = vmul.f32 %v642, %v703
        %v706 = vmul.f32 %v646, %v703
        %v707 = vmul.f32 %v650, %v703
        %v708 = vmul.f32 %v654, %v703
        %v709 = vmul.f32 %v658, %v703
        %v710 = vmul.f32 %v662, %v703
        %v711 = vmul.f32 %v666, %v703
        %v712 = vmul.f32 %v670, %v703
        %v713 = vmul.f32 %v674, %v703
        %v714 = vmul.f32 %v678, %v703
        %v715 = vmul.f32 %v682, %v703
        %v716 = vmul.f32 %v686, %v703
        %v717 = vmul.f32 %v690, %v703
        %v718 = vmul.f32 %v694, %v703
        %v719 = vmul.f32 %v698, %v703
        %v720 = vadd.f32 %v619, %v704
        %v721 = vadd.f32 %v620, %v705
        %v722 = vadd.f32 %v621, %v706
        %v723 = vadd.f32 %v622, %v707
        %v724 = vadd.f32 %v623, %v708
        %v725 = vadd.f32 %v624, %v709
        %v726 = vadd.f32 %v625, %v710
        %v727 = vadd.f32 %v626, %v711
        %v728 = vadd.f32 %v627, %v712
        %v729 = vadd.f32 %v628, %v713
        %v730 = vadd.f32 %v629, %v714
        %v731 = vadd.f32 %v630, %v715
        %v732 = vadd.f32 %v631, %v716
        %v733 = vadd.f32 %v632, %v717
        %v734 = vadd.f32 %v633, %v718
        %v735 = vadd.f32 %v634, %v719
        %v736 = vmax.f32 %v720, 0.0
        %v737 = vmax.f32 %v721, 0.0
        %v738 = vmax.f32 %v722, 0.0
        %v739 = vmax.f32 %v723, 0.0
        %v740 = vmax.f32 %v724, 0.0
        %v741 = vmax.f32 %v725, 0.0
        %v742 = vmax.f32 %v726, 0.0
        %v743 = vmax.f32 %v727, 0.0
        %v744 = vmax.f32 %v728, 0.0
        %v745 = vmax.f32 %v729, 0.0
        %v746 = vmax.f32 %v730, 0.0
        %v747 = vmax.f32 %v731, 0.0
        %v748 = vmax.f32 %v732, 0.0
        %v749 = vmax.f32 %v733, 0.0
        %v750 = vmax.f32 %v734, 0.0
        %v751 = vmax.f32 %v735, 0.0
        %752 = vst [vmem:[%s276] sm:$0xff] %v736
        %753 = vst [vmem:[%s276 + $0x8] sm:$0xff] %v737
        %754 = vst [vmem:[%s276 + $0x10] sm:$0xff] %v738
        %755 = vst [vmem:[%s276 + $0x18] sm:$0xff] %v739
        %756 = vst [vmem:[%s276 + $0x20] sm:$0xff] %v740
        %757 = vst [vmem:[%s276 + $0x28] sm:$0xff] %v741
        %758 = vst [vmem:[%s276 + $0x30] sm:$0xff] %v742
        %759 = vst [vmem:[%s276 + $0x38] sm:$0xff] %v743
        %760 = vst [vmem:[%s276 + $0x40] sm:$0xff] %v744
        %761 = vst [vmem:[%s276 + $0x48] sm:$0xff] %v745
        %762 = vst [vmem:[%s276 + $0x50] sm:$0xff] %v746
        %763 = vst [vmem:[%s276 + $0x58] sm:$0xff] %v747
        %764 = vst [vmem:[%s276 + $0x60] sm:$0xff] %v748
        %765 = vst [vmem:[%s276 + $0x68] sm:$0xff] %v749
        %766 = vst [vmem:[%s276 + $0x70] sm:$0xff] %v750
        %767 = vst [vmem:[%s276 + $0x78] sm:$0xff] %v751
        %v768 = vpack.c.bf16 %v737, %v736
        %v769 = vpack.c.bf16 %v739, %v738
        %v770 = vpack.c.bf16 %v741, %v740
        %v771 = vpack.c.bf16 %v743, %v742
        %v772 = vpack.c.bf16 %v745, %v744
        %v773 = vpack.c.bf16 %v747, %v746
        %v774 = vpack.c.bf16 %v749, %v748
        %v775 = vpack.c.bf16 %v751, %v750
        %v776 = vld [vmem:[%s3] sm:$0xf]
        %v777 = vld [vmem:[%s3 + $0x4] sm:$0xf]
        %v778 = vld [vmem:[%s3 + $0x8] sm:$0xf]
        %v779 = vld [vmem:[%s3 + $0xc] sm:$0xf]
        %v780 = vld [vmem:[%s3 + $0x10] sm:$0xf]
        %v781 = vld [vmem:[%s3 + $0x14] sm:$0xf]
        %v782 = vld [vmem:[%s3 + $0x18] sm:$0xf]
        %v783 = vld [vmem:[%s3 + $0x1c] sm:$0xf]
        %v784 = vld [vmem:[%s3 + $0x20] sm:$0xf]
        %v785 = vld [vmem:[%s3 + $0x24] sm:$0xf]
        %v786 = vld [vmem:[%s3 + $0x28] sm:$0xf]
        %v787 = vld [vmem:[%s3 + $0x2c] sm:$0xf]
        %v788 = vld [vmem:[%s3 + $0x30] sm:$0xf]
        %v789 = vld [vmem:[%s3 + $0x34] sm:$0xf]
        %v790 = vld [vmem:[%s3 + $0x38] sm:$0xf]
        %v791 = vld [vmem:[%s3 + $0x3c] sm:$0xf]
        %v792 = vld [vmem:[%s4] sm:$0x1]
        %v794 = vlaneseq
        %v795 = vshrl.u32 %v794, 7
        %v796 = vsub.s32 0, %v795
        %v797 = vrot.slane %v792, %v796
        %v815 = vunpack.c.l.b16 %v776
        %v816 = vunpack.c.l.b16 %v777
        %v817 = vunpack.c.l.b16 %v778
        %v818 = vunpack.c.l.b16 %v779
        %v819 = vunpack.c.l.b16 %v780
        %v820 = vunpack.c.l.b16 %v781
        %v821 = vunpack.c.l.b16 %v782
        %v822 = vunpack.c.l.b16 %v783
        %v823 = vunpack.c.l.b16 %v784
        %v824 = vunpack.c.l.b16 %v785
        %v825 = vunpack.c.l.b16 %v786
        %v826 = vunpack.c.l.b16 %v787
        %v827 = vunpack.c.l.b16 %v788
        %v828 = vunpack.c.l.b16 %v789
        %v829 = vunpack.c.l.b16 %v790
        %v830 = vunpack.c.l.b16 %v791
        %v831 = vpack.c.b16 %v816, %v815
        %v832 = vpack.c.b16 %v818, %v817
        %v833 = vpack.c.b16 %v820, %v819
        %v834 = vpack.c.b16 %v822, %v821
        %v835 = vpack.c.b16 %v824, %v823
        %v836 = vpack.c.b16 %v826, %v825
        %v837 = vpack.c.b16 %v828, %v827
        %v838 = vpack.c.b16 %v830, %v829
        %847 = vmatprep.subr.bf16.mxu0 0
        %848 = vmatpush1.bf16.msra.mxu0 %v831
        %849 = vmatprep.subr.bf16.mxu0 0
        %850 = vmatpush1.bf16.msra.mxu0 %v832
        %851 = vmatprep.subr.bf16.mxu0 0
        %852 = vmatpush1.bf16.msra.mxu0 %v833
        %853 = vmatprep.subr.bf16.mxu0 0
        %854 = vmatpush1.bf16.msra.mxu0 %v834
        %855 = vmatprep.subr.bf16.mxu0 0
        %856 = vmatpush1.bf16.msra.mxu0 %v835
        %857 = vmatprep.subr.bf16.mxu0 0
        %858 = vmatpush1.bf16.msra.mxu0 %v836
        %859 = vmatprep.subr.bf16.mxu0 0
        %860 = vmatpush1.bf16.msra.mxu0 %v837
        %861 = vmatprep.subr.bf16.mxu0 0
        %862 = vmatpush1.bf16.msra.mxu0 %v838
        %863 = vmatprep.subr.bf16.mxu0 0
        %864 = vmatpush1.bf16.msra.mxu0 0
        %865 = vmatprep.subr.bf16.mxu0 0
        %866 = vmatpush1.bf16.msra.mxu0 0
        %867 = vmatprep.subr.bf16.mxu0 0
        %868 = vmatpush1.bf16.msra.mxu0 0
        %869 = vmatprep.subr.bf16.mxu0 0
        %870 = vmatpush1.bf16.msra.mxu0 0
        %871 = vmatprep.subr.bf16.mxu0 0
        %872 = vmatpush1.bf16.msra.mxu0 0
        %873 = vmatprep.subr.bf16.mxu0 0
        %874 = vmatpush1.bf16.msra.mxu0 0
        %875 = vmatprep.subr.bf16.mxu0 0
        %876 = vmatpush1.bf16.msra.mxu0 0
        %877 = vmatprep.subr.bf16.mxu0 0
        %878 = vmatpush1.bf16.msra.mxu0 0
        %879 = vmatprep.mubr.bf16.mxu0 0
        %880 = vmatmul.mubr.bf16.gmra.mrb[0].mxu0 %v768
        %v881 = vpop.f32.mrb[0].mxu0
        %v882 = vadd.f32 %v797, %v881
        %v883 = vpop.f32.mrb[0].mxu0
        %v884 = vpop.f32.mrb[0].mxu0
        %v885 = vadd.f32 %v797, %v884
        %v886 = vpop.f32.mrb[0].mxu0
        %887 = vmatprep.mubr.bf16.mxu0 0
        %888 = vmatmul.mubr.bf16.gmra.mrb[0].mxu0 %v769
        %v889 = vpop.f32.mrb[0].mxu0
        %v890 = vadd.f32 %v797, %v889
        %v891 = vpop.f32.mrb[0].mxu0
        %v892 = vpop.f32.mrb[0].mxu0
        %v893 = vadd.f32 %v797, %v892
        %v894 = vpop.f32.mrb[0].mxu0
        %895 = vmatprep.mubr.bf16.mxu0 0
        %896 = vmatmul.mubr.bf16.gmra.mrb[0].mxu0 %v770
        %v897 = vpop.f32.mrb[0].mxu0
        %v898 = vadd.f32 %v797, %v897
        %v899 = vpop.f32.mrb[0].mxu0
        %v900 = vpop.f32.mrb[0].mxu0
        %v901 = vadd.f32 %v797, %v900
        %v902 = vpop.f32.mrb[0].mxu0
        %903 = vmatprep.mubr.bf16.mxu0 0
        %904 = vmatmul.mubr.bf16.gmra.mrb[0].mxu0 %v771
        %v905 = vpop.f32.mrb[0].mxu0
        %v906 = vadd.f32 %v797, %v905
        %v907 = vpop.f32.mrb[0].mxu0
        %v908 = vpop.f32.mrb[0].mxu0
        %v909 = vadd.f32 %v797, %v908
        %v910 = vpop.f32.mrb[0].mxu0
        %911 = vmatprep.mubr.bf16.mxu0 0
        %912 = vmatmul.mubr.bf16.gmra.mrb[0].mxu0 %v772
        %v913 = vpop.f32.mrb[0].mxu0
        %v914 = vadd.f32 %v797, %v913
        %v915 = vpop.f32.mrb[0].mxu0
        %v916 = vpop.f32.mrb[0].mxu0
        %v917 = vadd.f32 %v797, %v916
        %v918 = vpop.f32.mrb[0].mxu0
        %919 = vmatprep.mubr.bf16.mxu0 0
        %920 = vmatmul.mubr.bf16.gmra.mrb[0].mxu0 %v773
        %v921 = vpop.f32.mrb[0].mxu0
        %v922 = vadd.f32 %v797, %v921
        %v923 = vpop.f32.mrb[0].mxu0
        %v924 = vpop.f32.mrb[0].mxu0
        %v925 = vadd.f32 %v797, %v924
        %v926 = vpop.f32.mrb[0].mxu0
        %927 = vmatprep.mubr.bf16.mxu0 0
        %928 = vmatmul.mubr.bf16.gmra.mrb[0].mxu0 %v774
        %v929 = vpop.f32.mrb[0].mxu0
        %v930 = vadd.f32 %v797, %v929
        %v931 = vpop.f32.mrb[0].mxu0
        %v932 = vpop.f32.mrb[0].mxu0
        %v933 = vadd.f32 %v797, %v932
        %v934 = vpop.f32.mrb[0].mxu0
        %935 = vmatprep.mubr.bf16.mxu0 0
        %936 = vmatmul.mubr.bf16.gmra.mrb[0].mxu0 %v775
        %v937 = vpop.f32.mrb[0].mxu0
        %v938 = vadd.f32 %v797, %v937
        %v939 = vpop.f32.mrb[0].mxu0
        %v940 = vpop.f32.mrb[0].mxu0
        %v941 = vadd.f32 %v797, %v940
        %v942 = vpop.f32.mrb[0].mxu0
        %943 = vdwg.mxu0
        %v944 = vlaneseq
        %v945 = vand.u32 %v944, 127
        %vm946 = vcmp.ge.s32.totalorder %v945, 36
        %vm947 = vcmp.lt.s32.totalorder %v945, 40
        %vm948 = vmand %vm946, %vm947
        %vm949 = vcmp.eq.s32.totalorder %v945, 43
        %vm950 = vcmp.ge.s32.totalorder %v945, 44
        %vm951 = vcmp.lt.s32.totalorder %v945, 48
        %vm952 = vmand %vm950, %vm951
        %vm953 = vcmp.ge.s32.totalorder %v945, 48
        %vm954 = vcmp.lt.s32.totalorder %v945, 52
        %vm955 = vmand %vm953, %vm954
        %vm956 = vcmp.eq.s32.totalorder %v945, 55
        %vm957 = vcmp.ge.s32.totalorder %v945, 56
        %vm958 = vcmp.lt.s32.totalorder %v945, 60
        %vm959 = vmand %vm957, %vm958
        %vm960 = vmor %vm948, %vm955
        %vm961 = vmor %vm949, %vm956
        %vm962 = vmor %vm952, %vm959
        %vm963 = vcmp.ge.s32.totalorder %v945, 60
        %vm964 = vcmp.lt.s32.totalorder %v945, 64
        %vm965 = vmand %vm963, %vm964
        %vm966 = vcmp.eq.s32.totalorder %v945, 67
        %vm967 = vcmp.ge.s32.totalorder %v945, 68
        %vm968 = vcmp.lt.s32.totalorder %v945, 72
        %vm969 = vmand %vm967, %vm968
        %vm970 = vmor %vm960, %vm965
        %vm971 = vmor %vm961, %vm966
        %vm972 = vmor %vm962, %vm969
        %v973 = vsel %vm972, 1, 0
        %vm974 = vcmp.eq.s32.totalorder %v973, 1
        %v975 = vsel %vm974, %v882, -1e+30
        %v976 = vsel %vm974, %v885, -1e+30
        %v977 = vsel %vm974, %v890, -1e+30
        %v978 = vsel %vm974, %v893, -1e+30
        %v979 = vsel %vm974, %v898, -1e+30
        %v980 = vsel %vm974, %v901, -1e+30
        %v981 = vsel %vm974, %v906, -1e+30
        %v982 = vsel %vm974, %v909, -1e+30
        %v983 = vsel %vm974, %v914, -1e+30
        %v984 = vsel %vm974, %v917, -1e+30
        %v985 = vsel %vm974, %v922, -1e+30
        %v986 = vsel %vm974, %v925, -1e+30
        %v987 = vsel %vm974, %v930, -1e+30
        %v988 = vsel %vm974, %v933, -1e+30
        %v989 = vsel %vm974, %v938, -1e+30
        %v990 = vsel %vm974, %v941, -1e+30
        %991 = vmax.xlane.f32.xlu0 %v975
        %v992 = vpop.xlane.xlu0 %991
        %993 = vmax.xlane.f32.xlu0 %v976
        %v994 = vpop.xlane.xlu0 %993
        %995 = vmax.xlane.f32.xlu0 %v977
        %v996 = vpop.xlane.xlu0 %995
        %997 = vmax.xlane.f32.xlu0 %v978
        %v998 = vpop.xlane.xlu0 %997
        %999 = vmax.xlane.f32.xlu0 %v979
        %v1000 = vpop.xlane.xlu0 %999
        %1001 = vmax.xlane.f32.xlu0 %v980
        %v1002 = vpop.xlane.xlu0 %1001
        %1003 = vmax.xlane.f32.xlu0 %v981
        %v1004 = vpop.xlane.xlu0 %1003
        %1005 = vmax.xlane.f32.xlu0 %v982
        %v1006 = vpop.xlane.xlu0 %1005
        %1007 = vmax.xlane.f32.xlu0 %v983
        %v1008 = vpop.xlane.xlu0 %1007
        %1009 = vmax.xlane.f32.xlu0 %v984
        %v1010 = vpop.xlane.xlu0 %1009
        %1011 = vmax.xlane.f32.xlu0 %v985
        %v1012 = vpop.xlane.xlu0 %1011
        %1013 = vmax.xlane.f32.xlu0 %v986
        %v1014 = vpop.xlane.xlu0 %1013
        %1015 = vmax.xlane.f32.xlu0 %v987
        %v1016 = vpop.xlane.xlu0 %1015
        %1017 = vmax.xlane.f32.xlu0 %v988
        %v1018 = vpop.xlane.xlu0 %1017
        %1019 = vmax.xlane.f32.xlu0 %v989
        %v1020 = vpop.xlane.xlu0 %1019
        %1021 = vmax.xlane.f32.xlu0 %v990
        %v1022 = vpop.xlane.xlu0 %1021
        %v1023 = vsub.f32 %v882, %v992
        %v1024 = vsub.f32 %v885, %v994
        %v1025 = vsub.f32 %v890, %v996
        %v1026 = vsub.f32 %v893, %v998
        %v1027 = vsub.f32 %v898, %v1000
        %v1028 = vsub.f32 %v901, %v1002
        %v1029 = vsub.f32 %v906, %v1004
        %v1030 = vsub.f32 %v909, %v1006
        %v1031 = vsub.f32 %v914, %v1008
        %v1032 = vsub.f32 %v917, %v1010
        %v1033 = vsub.f32 %v922, %v1012
        %v1034 = vsub.f32 %v925, %v1014
        %v1035 = vsub.f32 %v930, %v1016
        %v1036 = vsub.f32 %v933, %v1018
        %v1037 = vsub.f32 %v938, %v1020
        %v1038 = vsub.f32 %v941, %v1022
        %v1039 = vsub.f32 0.0, %v882
        %v1040 = vsub.f32 0.0, %v885
        %v1041 = vsub.f32 0.0, %v890
        %v1042 = vsub.f32 0.0, %v893
        %v1043 = vsub.f32 0.0, %v898
        %v1044 = vsub.f32 0.0, %v901
        %v1045 = vsub.f32 0.0, %v906
        %v1046 = vsub.f32 0.0, %v909
        %v1047 = vsub.f32 0.0, %v914
        %v1048 = vsub.f32 0.0, %v917
        %v1049 = vsub.f32 0.0, %v922
        %v1050 = vsub.f32 0.0, %v925
        %v1051 = vsub.f32 0.0, %v930
        %v1052 = vsub.f32 0.0, %v933
        %v1053 = vsub.f32 0.0, %v938
        %v1054 = vsub.f32 0.0, %v941
        %v1055 = vsel %vm971, 1, 0
        %vm1056 = vcmp.eq.s32.totalorder %v1055, 1
        %v1057 = vsel %vm1056, %v1039, 0.0
        %v1058 = vsel %vm1056, %v1040, 0.0
        %v1059 = vsel %vm1056, %v1041, 0.0
        %v1060 = vsel %vm1056, %v1042, 0.0
        %v1061 = vsel %vm1056, %v1043, 0.0
        %v1062 = vsel %vm1056, %v1044, 0.0
        %v1063 = vsel %vm1056, %v1045, 0.0
        %v1064 = vsel %vm1056, %v1046, 0.0
        %v1065 = vsel %vm1056, %v1047, 0.0
        %v1066 = vsel %vm1056, %v1048, 0.0
        %v1067 = vsel %vm1056, %v1049, 0.0
        %v1068 = vsel %vm1056, %v1050, 0.0
        %v1069 = vsel %vm1056, %v1051, 0.0
        %v1070 = vsel %vm1056, %v1052, 0.0
        %v1071 = vsel %vm1056, %v1053, 0.0
        %v1072 = vsel %vm1056, %v1054, 0.0
        %v1073 = vsel %vm974, %v1023, %v1057
        %v1074 = vsel %vm974, %v1024, %v1058
        %v1075 = vsel %vm974, %v1025, %v1059
        %v1076 = vsel %vm974, %v1026, %v1060
        %v1077 = vsel %vm974, %v1027, %v1061
        %v1078 = vsel %vm974, %v1028, %v1062
        %v1079 = vsel %vm974, %v1029, %v1063
        %v1080 = vsel %vm974, %v1030, %v1064
        %v1081 = vsel %vm974, %v1031, %v1065
        %v1082 = vsel %vm974, %v1032, %v1066
        %v1083 = vsel %vm974, %v1033, %v1067
        %v1084 = vsel %vm974, %v1034, %v1068
        %v1085 = vsel %vm974, %v1035, %v1069
        %v1086 = vsel %vm974, %v1036, %v1070
        %v1087 = vsel %vm974, %v1037, %v1071
        %v1088 = vsel %vm974, %v1038, %v1072
        %v1089 = vmul.f32 %v1073, 1.442695
        %v1090 = vpow.pop %v1089
        %v1091 = vmul.f32 %v1074, 1.442695
        %v1092 = vpow.pop %v1091
        %v1093 = vmul.f32 %v1075, 1.442695
        %v1094 = vpow.pop %v1093
        %v1095 = vmul.f32 %v1076, 1.442695
        %v1096 = vpow.pop %v1095
        %v1097 = vmul.f32 %v1077, 1.442695
        %v1098 = vpow.pop %v1097
        %v1099 = vmul.f32 %v1078, 1.442695
        %v1100 = vpow.pop %v1099
        %v1101 = vmul.f32 %v1079, 1.442695
        %v1102 = vpow.pop %v1101
        %v1103 = vmul.f32 %v1080, 1.442695
        %v1104 = vpow.pop %v1103
        %v1105 = vmul.f32 %v1081, 1.442695
        %v1106 = vpow.pop %v1105
        %v1107 = vmul.f32 %v1082, 1.442695
        %v1108 = vpow.pop %v1107
        %v1109 = vmul.f32 %v1083, 1.442695
        %v1110 = vpow.pop %v1109
        %v1111 = vmul.f32 %v1084, 1.442695
        %v1112 = vpow.pop %v1111
        %v1113 = vmul.f32 %v1085, 1.442695
        %v1114 = vpow.pop %v1113
        %v1115 = vmul.f32 %v1086, 1.442695
        %v1116 = vpow.pop %v1115
        %v1117 = vmul.f32 %v1087, 1.442695
        %v1118 = vpow.pop %v1117
        %v1119 = vmul.f32 %v1088, 1.442695
        %v1120 = vpow.pop %v1119
        %v1121 = vmul.f32 %v882, %v882
        %v1122 = vmul.f32 %v885, %v885
        %v1123 = vmul.f32 %v890, %v890
        %v1124 = vmul.f32 %v893, %v893
        %v1125 = vmul.f32 %v898, %v898
        %v1126 = vmul.f32 %v901, %v901
        %v1127 = vmul.f32 %v906, %v906
        %v1128 = vmul.f32 %v909, %v909
        %v1129 = vmul.f32 %v914, %v914
        %v1130 = vmul.f32 %v917, %v917
        %v1131 = vmul.f32 %v922, %v922
        %v1132 = vmul.f32 %v925, %v925
        %v1133 = vmul.f32 %v930, %v930
        %v1134 = vmul.f32 %v933, %v933
        %v1135 = vmul.f32 %v938, %v938
        %v1136 = vmul.f32 %v941, %v941
        %v1137 = vsel %vm974, %v1090, 0.0
        %v1138 = vsel %vm974, %v1092, 0.0
        %v1139 = vsel %vm974, %v1094, 0.0
        %v1140 = vsel %vm974, %v1096, 0.0
        %v1141 = vsel %vm974, %v1098, 0.0
        %v1142 = vsel %vm974, %v1100, 0.0
        %v1143 = vsel %vm974, %v1102, 0.0
        %v1144 = vsel %vm974, %v1104, 0.0
        %v1145 = vsel %vm974, %v1106, 0.0
        %v1146 = vsel %vm974, %v1108, 0.0
        %v1147 = vsel %vm974, %v1110, 0.0
        %v1148 = vsel %vm974, %v1112, 0.0
        %v1149 = vsel %vm974, %v1114, 0.0
        %v1150 = vsel %vm974, %v1116, 0.0
        %v1151 = vsel %vm974, %v1118, 0.0
        %v1152 = vsel %vm974, %v1120, 0.0
        %v1153 = vsel %vm970, 1, 0
        %vm1154 = vcmp.eq.s32.totalorder %v1153, 1
        %v1155 = vsel %vm1154, %v1121, %v1137
        %v1156 = vsel %vm1154, %v1122, %v1138
        %v1157 = vsel %vm1154, %v1123, %v1139
        %v1158 = vsel %vm1154, %v1124, %v1140
        %v1159 = vsel %vm1154, %v1125, %v1141
        %v1160 = vsel %vm1154, %v1126, %v1142
        %v1161 = vsel %vm1154, %v1127, %v1143
        %v1162 = vsel %vm1154, %v1128, %v1144
        %v1163 = vsel %vm1154, %v1129, %v1145
        %v1164 = vsel %vm1154, %v1130, %v1146
        %v1165 = vsel %vm1154, %v1131, %v1147
        %v1166 = vsel %vm1154, %v1132, %v1148
        %v1167 = vsel %vm1154, %v1133, %v1149
        %v1168 = vsel %vm1154, %v1134, %v1150
        %v1169 = vsel %vm1154, %v1135, %v1151
        %v1170 = vsel %vm1154, %v1136, %v1152
        %v1171 = vpack.c.bf16 %v1156, %v1155
        %v1172 = vpack.c.bf16 %v1158, %v1157
        %v1173 = vpack.c.bf16 %v1160, %v1159
        %v1174 = vpack.c.bf16 %v1162, %v1161
        %v1175 = vpack.c.bf16 %v1164, %v1163
        %v1176 = vpack.c.bf16 %v1166, %v1165
        %v1177 = vpack.c.bf16 %v1168, %v1167
        %v1178 = vpack.c.bf16 %v1170, %v1169
        %v1179 = vld [vmem:[%s5] sm:$0xf]
        %v1180 = vld [vmem:[%s5 + $0x4] sm:$0xf]
        %v1181 = vld [vmem:[%s5 + $0x8] sm:$0xf]
        %v1182 = vld [vmem:[%s5 + $0xc] sm:$0xf]
        %v1183 = vld [vmem:[%s5 + $0x10] sm:$0xf]
        %v1184 = vld [vmem:[%s5 + $0x14] sm:$0xf]
        %v1185 = vld [vmem:[%s5 + $0x18] sm:$0xf]
        %v1186 = vld [vmem:[%s5 + $0x1c] sm:$0xf]
        %v1187 = vld [vmem:[%s5 + $0x20] sm:$0xf]
        %v1188 = vld [vmem:[%s5 + $0x24] sm:$0xf]
        %v1189 = vld [vmem:[%s5 + $0x28] sm:$0xf]
        %v1190 = vld [vmem:[%s5 + $0x2c] sm:$0xf]
        %v1191 = vld [vmem:[%s5 + $0x30] sm:$0xf]
        %v1192 = vld [vmem:[%s5 + $0x34] sm:$0xf]
        %v1193 = vld [vmem:[%s5 + $0x38] sm:$0xf]
        %v1194 = vld [vmem:[%s5 + $0x3c] sm:$0xf]
        %v1211 = vunpack.c.l.b16 %v1179
        %v1212 = vunpack.c.l.b16 %v1180
        %v1213 = vunpack.c.l.b16 %v1181
        %v1214 = vunpack.c.l.b16 %v1182
        %v1215 = vunpack.c.l.b16 %v1183
        %v1216 = vunpack.c.l.b16 %v1184
        %v1217 = vunpack.c.l.b16 %v1185
        %v1218 = vunpack.c.l.b16 %v1186
        %v1219 = vunpack.c.l.b16 %v1187
        %v1220 = vunpack.c.l.b16 %v1188
        %v1221 = vunpack.c.l.b16 %v1189
        %v1222 = vunpack.c.l.b16 %v1190
        %v1223 = vunpack.c.l.b16 %v1191
        %v1224 = vunpack.c.l.b16 %v1192
        %v1225 = vunpack.c.l.b16 %v1193
        %v1226 = vunpack.c.l.b16 %v1194
        %v1227 = vpack.c.b16 %v1212, %v1211
        %v1228 = vpack.c.b16 %v1214, %v1213
        %v1229 = vpack.c.b16 %v1216, %v1215
        %v1230 = vpack.c.b16 %v1218, %v1217
        %v1231 = vpack.c.b16 %v1220, %v1219
        %v1232 = vpack.c.b16 %v1222, %v1221
        %v1233 = vpack.c.b16 %v1224, %v1223
        %v1234 = vpack.c.b16 %v1226, %v1225
        %1243 = vmatprep.subr.bf16.mxu0 0
        %1244 = vmatpush1.bf16.msra.mxu0 %v1227
        %1245 = vmatprep.subr.bf16.mxu0 0
        %1246 = vmatpush1.bf16.msra.mxu0 %v1228
        %1247 = vmatprep.subr.bf16.mxu0 0
        %1248 = vmatpush1.bf16.msra.mxu0 %v1229
        %1249 = vmatprep.subr.bf16.mxu0 0
        %1250 = vmatpush1.bf16.msra.mxu0 %v1230
        %1251 = vmatprep.subr.bf16.mxu0 0
        %1252 = vmatpush1.bf16.msra.mxu0 %v1231
        %1253 = vmatprep.subr.bf16.mxu0 0
        %1254 = vmatpush1.bf16.msra.mxu0 %v1232
        %1255 = vmatprep.subr.bf16.mxu0 0
        %1256 = vmatpush1.bf16.msra.mxu0 %v1233
        %1257 = vmatprep.subr.bf16.mxu0 0
        %1258 = vmatpush1.bf16.msra.mxu0 %v1234
        %1259 = vmatprep.subr.bf16.mxu0 0
        %1260 = vmatpush1.bf16.msra.mxu0 0
        %1261 = vmatprep.subr.bf16.mxu0 0
        %1262 = vmatpush1.bf16.msra.mxu0 0
        %1263 = vmatprep.subr.bf16.mxu0 0
        %1264 = vmatpush1.bf16.msra.mxu0 0
        %1265 = vmatprep.subr.bf16.mxu0 0
        %1266 = vmatpush1.bf16.msra.mxu0 0
        %1267 = vmatprep.subr.bf16.mxu0 0
        %1268 = vmatpush1.bf16.msra.mxu0 0
        %1269 = vmatprep.subr.bf16.mxu0 0
        %1270 = vmatpush1.bf16.msra.mxu0 0
        %1271 = vmatprep.subr.bf16.mxu0 0
        %1272 = vmatpush1.bf16.msra.mxu0 0
        %1273 = vmatprep.subr.bf16.mxu0 0
        %1274 = vmatpush1.bf16.msra.mxu0 0
        %1275 = vmatprep.mubr.bf16.mxu0 0
        %1276 = vmatmul.mubr.bf16.gmra.mrb[0].mxu0 %v1171
        %v1277 = vpop.f32.mrb[0].mxu0
        %v1278 = vadd.f32 0.0, %v1277
        %v1279 = vpop.f32.mrb[0].mxu0
        %v1280 = vpop.f32.mrb[0].mxu0
        %v1281 = vadd.f32 0.0, %v1280
        %v1282 = vpop.f32.mrb[0].mxu0
        %1283 = vmatprep.mubr.bf16.mxu0 0
        %1284 = vmatmul.mubr.bf16.gmra.mrb[0].mxu0 %v1172
        %v1285 = vpop.f32.mrb[0].mxu0
        %v1286 = vadd.f32 0.0, %v1285
        %v1287 = vpop.f32.mrb[0].mxu0
        %v1288 = vpop.f32.mrb[0].mxu0
        %v1289 = vadd.f32 0.0, %v1288
        %v1290 = vpop.f32.mrb[0].mxu0
        %1291 = vmatprep.mubr.bf16.mxu0 0
        %1292 = vmatmul.mubr.bf16.gmra.mrb[0].mxu0 %v1173
        %v1293 = vpop.f32.mrb[0].mxu0
        %v1294 = vadd.f32 0.0, %v1293
        %v1295 = vpop.f32.mrb[0].mxu0
        %v1296 = vpop.f32.mrb[0].mxu0
        %v1297 = vadd.f32 0.0, %v1296
        %v1298 = vpop.f32.mrb[0].mxu0
        %1299 = vmatprep.mubr.bf16.mxu0 0
        %1300 = vmatmul.mubr.bf16.gmra.mrb[0].mxu0 %v1174
        %v1301 = vpop.f32.mrb[0].mxu0
        %v1302 = vadd.f32 0.0, %v1301
        %v1303 = vpop.f32.mrb[0].mxu0
        %v1304 = vpop.f32.mrb[0].mxu0
        %v1305 = vadd.f32 0.0, %v1304
        %v1306 = vpop.f32.mrb[0].mxu0
        %1307 = vmatprep.mubr.bf16.mxu0 0
        %1308 = vmatmul.mubr.bf16.gmra.mrb[0].mxu0 %v1175
        %v1309 = vpop.f32.mrb[0].mxu0
        %v1310 = vadd.f32 0.0, %v1309
        %v1311 = vpop.f32.mrb[0].mxu0
        %v1312 = vpop.f32.mrb[0].mxu0
        %v1313 = vadd.f32 0.0, %v1312
        %v1314 = vpop.f32.mrb[0].mxu0
        %1315 = vmatprep.mubr.bf16.mxu0 0
        %1316 = vmatmul.mubr.bf16.gmra.mrb[0].mxu0 %v1176
        %v1317 = vpop.f32.mrb[0].mxu0
        %v1318 = vadd.f32 0.0, %v1317
        %v1319 = vpop.f32.mrb[0].mxu0
        %v1320 = vpop.f32.mrb[0].mxu0
        %v1321 = vadd.f32 0.0, %v1320
        %v1322 = vpop.f32.mrb[0].mxu0
        %1323 = vmatprep.mubr.bf16.mxu0 0
        %1324 = vmatmul.mubr.bf16.gmra.mrb[0].mxu0 %v1177
        %v1325 = vpop.f32.mrb[0].mxu0
        %v1326 = vadd.f32 0.0, %v1325
        %v1327 = vpop.f32.mrb[0].mxu0
        %v1328 = vpop.f32.mrb[0].mxu0
        %v1329 = vadd.f32 0.0, %v1328
        %v1330 = vpop.f32.mrb[0].mxu0
        %1331 = vmatprep.mubr.bf16.mxu0 0
        %1332 = vmatmul.mubr.bf16.gmra.mrb[0].mxu0 %v1178
        %v1333 = vpop.f32.mrb[0].mxu0
        %v1334 = vadd.f32 0.0, %v1333
        %v1335 = vpop.f32.mrb[0].mxu0
        %v1336 = vpop.f32.mrb[0].mxu0
        %v1337 = vadd.f32 0.0, %v1336
        %v1338 = vpop.f32.mrb[0].mxu0
        %1339 = vdwg.mxu0
        %v1340 = vadd.f32 %v1090, 1.0
        %v1341 = vadd.f32 %v1092, 1.0
        %v1342 = vadd.f32 %v1094, 1.0
        %v1343 = vadd.f32 %v1096, 1.0
        %v1344 = vadd.f32 %v1098, 1.0
        %v1345 = vadd.f32 %v1100, 1.0
        %v1346 = vadd.f32 %v1102, 1.0
        %v1347 = vadd.f32 %v1104, 1.0
        %v1348 = vadd.f32 %v1106, 1.0
        %v1349 = vadd.f32 %v1108, 1.0
        %v1350 = vadd.f32 %v1110, 1.0
        %v1351 = vadd.f32 %v1112, 1.0
        %v1352 = vadd.f32 %v1114, 1.0
        %v1353 = vadd.f32 %v1116, 1.0
        %v1354 = vadd.f32 %v1118, 1.0
        %v1355 = vadd.f32 %v1120, 1.0
        %v1356 = vmax.f32 %v1278, 1e-30
        %v1357 = vmax.f32 %v1281, 1e-30
        %v1358 = vmax.f32 %v1286, 1e-30
        %v1359 = vmax.f32 %v1289, 1e-30
        %v1360 = vmax.f32 %v1294, 1e-30
        %v1361 = vmax.f32 %v1297, 1e-30
        %v1362 = vmax.f32 %v1302, 1e-30
        %v1363 = vmax.f32 %v1305, 1e-30
        %v1364 = vmax.f32 %v1310, 1e-30
        %v1365 = vmax.f32 %v1313, 1e-30
        %v1366 = vmax.f32 %v1318, 1e-30
        %v1367 = vmax.f32 %v1321, 1e-30
        %v1368 = vmax.f32 %v1326, 1e-30
        %v1369 = vmax.f32 %v1329, 1e-30
        %v1370 = vmax.f32 %v1334, 1e-30
        %v1371 = vmax.f32 %v1337, 1e-30
        %v1372 = vsel %vm1056, %v1340, %v1356
        %v1373 = vsel %vm1056, %v1341, %v1357
        %v1374 = vsel %vm1056, %v1342, %v1358
        %v1375 = vsel %vm1056, %v1343, %v1359
        %v1376 = vsel %vm1056, %v1344, %v1360
        %v1377 = vsel %vm1056, %v1345, %v1361
        %v1378 = vsel %vm1056, %v1346, %v1362
        %v1379 = vsel %vm1056, %v1347, %v1363
        %v1380 = vsel %vm1056, %v1348, %v1364
        %v1381 = vsel %vm1056, %v1349, %v1365
        %v1382 = vsel %vm1056, %v1350, %v1366
        %v1383 = vsel %vm1056, %v1351, %v1367
        %v1384 = vsel %vm1056, %v1352, %v1368
        %v1385 = vsel %vm1056, %v1353, %v1369
        %v1386 = vsel %vm1056, %v1354, %v1370
        %v1387 = vsel %vm1056, %v1355, %v1371
        %v1388 = vrcp.pop %v1372
        %v1389 = vrcp.pop %v1373
        %v1390 = vrcp.pop %v1374
        %v1391 = vrcp.pop %v1375
        %v1392 = vrcp.pop %v1376
        %v1393 = vrcp.pop %v1377
        %v1394 = vrcp.pop %v1378
        %v1395 = vrcp.pop %v1379
        %v1396 = vrcp.pop %v1380
        %v1397 = vrcp.pop %v1381
        %v1398 = vrcp.pop %v1382
        %v1399 = vrcp.pop %v1383
        %v1400 = vrcp.pop %v1384
        %v1401 = vrcp.pop %v1385
        %v1402 = vrcp.pop %v1386
        %v1403 = vrcp.pop %v1387
        %v1404 = vmax.f32 %v1278, 1e-24
        %v1405 = vmax.f32 %v1281, 1e-24
        %v1406 = vmax.f32 %v1286, 1e-24
        %v1407 = vmax.f32 %v1289, 1e-24
        %v1408 = vmax.f32 %v1294, 1e-24
        %v1409 = vmax.f32 %v1297, 1e-24
        %v1410 = vmax.f32 %v1302, 1e-24
        %v1411 = vmax.f32 %v1305, 1e-24
        %v1412 = vmax.f32 %v1310, 1e-24
        %v1413 = vmax.f32 %v1313, 1e-24
        %v1414 = vmax.f32 %v1318, 1e-24
        %v1415 = vmax.f32 %v1321, 1e-24
        %v1416 = vmax.f32 %v1326, 1e-24
        %v1417 = vmax.f32 %v1329, 1e-24
        %v1418 = vmax.f32 %v1334, 1e-24
        %v1419 = vmax.f32 %v1337, 1e-24
        %v1420 = vrsqrt.pop %v1404
        %v1421 = vrsqrt.pop %v1405
        %v1422 = vrsqrt.pop %v1406
        %v1423 = vrsqrt.pop %v1407
        %v1424 = vrsqrt.pop %v1408
        %v1425 = vrsqrt.pop %v1409
        %v1426 = vrsqrt.pop %v1410
        %v1427 = vrsqrt.pop %v1411
        %v1428 = vrsqrt.pop %v1412
        %v1429 = vrsqrt.pop %v1413
        %v1430 = vrsqrt.pop %v1414
        %v1431 = vrsqrt.pop %v1415
        %v1432 = vrsqrt.pop %v1416
        %v1433 = vrsqrt.pop %v1417
        %v1434 = vrsqrt.pop %v1418
        %v1435 = vrsqrt.pop %v1419
        %v1436 = vmul.f32 %v882, %v1420
        %v1437 = vmul.f32 %v885, %v1421
        %v1438 = vmul.f32 %v890, %v1422
        %v1439 = vmul.f32 %v893, %v1423
        %v1440 = vmul.f32 %v898, %v1424
        %v1441 = vmul.f32 %v901, %v1425
        %v1442 = vmul.f32 %v906, %v1426
        %v1443 = vmul.f32 %v909, %v1427
        %v1444 = vmul.f32 %v914, %v1428
        %v1445 = vmul.f32 %v917, %v1429
        %v1446 = vmul.f32 %v922, %v1430
        %v1447 = vmul.f32 %v925, %v1431
        %v1448 = vmul.f32 %v930, %v1432
        %v1449 = vmul.f32 %v933, %v1433
        %v1450 = vmul.f32 %v938, %v1434
        %v1451 = vmul.f32 %v941, %v1435
        %v1452 = vmul.f32 %v1090, %v1388
        %v1453 = vmul.f32 %v1092, %v1389
        %v1454 = vmul.f32 %v1094, %v1390
        %v1455 = vmul.f32 %v1096, %v1391
        %v1456 = vmul.f32 %v1098, %v1392
        %v1457 = vmul.f32 %v1100, %v1393
        %v1458 = vmul.f32 %v1102, %v1394
        %v1459 = vmul.f32 %v1104, %v1395
        %v1460 = vmul.f32 %v1106, %v1396
        %v1461 = vmul.f32 %v1108, %v1397
        %v1462 = vmul.f32 %v1110, %v1398
        %v1463 = vmul.f32 %v1112, %v1399
        %v1464 = vmul.f32 %v1114, %v1400
        %v1465 = vmul.f32 %v1116, %v1401
        %v1466 = vmul.f32 %v1118, %v1402
        %v1467 = vmul.f32 %v1120, %v1403
        %v1468 = vsel %vm1056, %v1388, %v882
        %v1469 = vsel %vm1056, %v1389, %v885
        %v1470 = vsel %vm1056, %v1390, %v890
        %v1471 = vsel %vm1056, %v1391, %v893
        %v1472 = vsel %vm1056, %v1392, %v898
        %v1473 = vsel %vm1056, %v1393, %v901
        %v1474 = vsel %vm1056, %v1394, %v906
        %v1475 = vsel %vm1056, %v1395, %v909
        %v1476 = vsel %vm1056, %v1396, %v914
        %v1477 = vsel %vm1056, %v1397, %v917
        %v1478 = vsel %vm1056, %v1398, %v922
        %v1479 = vsel %vm1056, %v1399, %v925
        %v1480 = vsel %vm1056, %v1400, %v930
        %v1481 = vsel %vm1056, %v1401, %v933
        %v1482 = vsel %vm1056, %v1402, %v938
        %v1483 = vsel %vm1056, %v1403, %v941
        %v1484 = vsel %vm974, %v1452, %v1468
        %v1485 = vsel %vm974, %v1453, %v1469
        %v1486 = vsel %vm974, %v1454, %v1470
        %v1487 = vsel %vm974, %v1455, %v1471
        %v1488 = vsel %vm974, %v1456, %v1472
        %v1489 = vsel %vm974, %v1457, %v1473
        %v1490 = vsel %vm974, %v1458, %v1474
        %v1491 = vsel %vm974, %v1459, %v1475
        %v1492 = vsel %vm974, %v1460, %v1476
        %v1493 = vsel %vm974, %v1461, %v1477
        %v1494 = vsel %vm974, %v1462, %v1478
        %v1495 = vsel %vm974, %v1463, %v1479
        %v1496 = vsel %vm974, %v1464, %v1480
        %v1497 = vsel %vm974, %v1465, %v1481
        %v1498 = vsel %vm974, %v1466, %v1482
        %v1499 = vsel %vm974, %v1467, %v1483
        %v1500 = vsel %vm1154, %v1436, %v1484
        %v1501 = vsel %vm1154, %v1437, %v1485
        %v1502 = vsel %vm1154, %v1438, %v1486
        %v1503 = vsel %vm1154, %v1439, %v1487
        %v1504 = vsel %vm1154, %v1440, %v1488
        %v1505 = vsel %vm1154, %v1441, %v1489
        %v1506 = vsel %vm1154, %v1442, %v1490
        %v1507 = vsel %vm1154, %v1443, %v1491
        %v1508 = vsel %vm1154, %v1444, %v1492
        %v1509 = vsel %vm1154, %v1445, %v1493
        %v1510 = vsel %vm1154, %v1446, %v1494
        %v1511 = vsel %vm1154, %v1447, %v1495
        %v1512 = vsel %vm1154, %v1448, %v1496
        %v1513 = vsel %vm1154, %v1449, %v1497
        %v1514 = vsel %vm1154, %v1450, %v1498
        %v1515 = vsel %vm1154, %v1451, %v1499
        %1516 = vst [vmem:[%s283] sm:$0xff] %v1500
        %1517 = vst [vmem:[%s283 + $0x8] sm:$0xff] %v1501
        %1518 = vst [vmem:[%s283 + $0x10] sm:$0xff] %v1502
        %1519 = vst [vmem:[%s283 + $0x18] sm:$0xff] %v1503
        %1520 = vst [vmem:[%s283 + $0x20] sm:$0xff] %v1504
        %1521 = vst [vmem:[%s283 + $0x28] sm:$0xff] %v1505
        %1522 = vst [vmem:[%s283 + $0x30] sm:$0xff] %v1506
        %1523 = vst [vmem:[%s283 + $0x38] sm:$0xff] %v1507
        %1524 = vst [vmem:[%s283 + $0x40] sm:$0xff] %v1508
        %1525 = vst [vmem:[%s283 + $0x48] sm:$0xff] %v1509
        %1526 = vst [vmem:[%s283 + $0x50] sm:$0xff] %v1510
        %1527 = vst [vmem:[%s283 + $0x58] sm:$0xff] %v1511
        %1528 = vst [vmem:[%s283 + $0x60] sm:$0xff] %v1512
        %1529 = vst [vmem:[%s283 + $0x68] sm:$0xff] %v1513
        %1530 = vst [vmem:[%s283 + $0x70] sm:$0xff] %v1514
        %1531 = vst [vmem:[%s283 + $0x78] sm:$0xff] %v1515
        %s1532 = sand.u32 %s164, 1
        %s1533 = scalar_lea.sflag [#allocation3], %s1532
        %s1534 = sand.u32 %s164, 1
        %s1535 = smul.addr %s1534, 128
        %s1536 = scalar_lea.vmem [#allocation2], %s1535
        %s1537 = sand.u32 %s190, 1
        %s1538 = scalar_lea.sflag [#allocation5], %s1537
        %s1539 = sand.u32 %s190, 1
        %s1540 = smul.addr %s1539, 128
        %s1541 = scalar_lea.vmem [#allocation4], %s1540
        // Predicated region
        $region45: #{tpu_custom_call.1} parent=43 // pred_check
          %p1542 = pneg %p174
        $region46: #{tpu_custom_call.1} parent=43 // pred_check_branch
          %1544 = sbr.rel (%p1542) target = $region48
        $region47: #{tpu_custom_call.1} parent=43 // pred_region
          %s1545 = smul.u32 16, %s25
          %s1547 = ssub.s32 2048, 2048
          %1548 = vsyncadd %s1533, %s1547
          %s1549 = smul.addr %s1545, 128
          %s1550 = scalar_lea.hbm %s6, %s1549
          %s1551 = sshll.u32 %s1536, 4
          %s1552 = int_to_ptr.vmem [resolvable:$true] %s1551
          %1557 = dma.vmem_to_hbm [thread:$0]  %s1552, 2048, %s1550, %s1533, 128, 128, 8
        $region48: #{tpu_custom_call.1} parent=43 // pred_fallthru
          _
        // Predicated region
        $region49: #{tpu_custom_call.1} parent=43 // pred_check
          %p1558 = pneg %p200
        $region50: #{tpu_custom_call.1} parent=43 // pred_check_branch
          %1560 = sbr.rel (%p1558) target = $region52
        $region51: #{tpu_custom_call.1} parent=43 // pred_region
          %s1561 = smul.u32 16, %s25
          %s1563 = ssub.s32 2048, 2048
          %1564 = vsyncadd %s1538, %s1563
          %s1565 = smul.addr %s1561, 128
          %s1566 = scalar_lea.hbm %s7, %s1565
          %s1567 = sshll.u32 %s1541, 4
          %s1568 = int_to_ptr.vmem [resolvable:$true] %s1567
          %1573 = dma.vmem_to_hbm [thread:$0]  %s1568, 2048, %s1566, %s1538, 128, 128, 8
        $region52: #{tpu_custom_call.1} parent=43 // pred_fallthru
          _
      $region44: #{tpu_custom_call.1} parent=5 // pred_fallthru
        _
      %p1574 = scmp.le.s32.totalorder 2, %s20
      // Predicated region
      $region53: #{tpu_custom_call.1} parent=5 // pred_check
        %p1575 = pneg %p1574
      $region54: #{tpu_custom_call.1} parent=5 // pred_check_branch
        %1577 = sbr.rel (%p1575) target = $region56
      $region55: #{tpu_custom_call.1} parent=5 // pred_region
        %s1578 = ssub.s32 %s20, 2
        // Predicated region
        $region57: #{tpu_custom_call.1} parent=55 // pred_check
          %p1579 = pneg %p180
        $region58: #{tpu_custom_call.1} parent=55 // pred_check_branch
          %1581 = sbr.rel (%p1579) target = $region60
        $region59: #{tpu_custom_call.1} parent=55 // pred_region
          %s1582 = sand.u32 %s165, 1
          %s1583 = scalar_lea.sflag [#allocation3], %s1582
          %s1584 = sand.u32 %s165, 1
          %s1585 = smul.addr %s1584, 128
          %s1586 = scalar_lea.vmem [#allocation2], %s1585
          %1587 = dma.done %s1583, 2048
        $region60: #{tpu_custom_call.1} parent=55 // pred_fallthru
          _
        // Predicated region
        $region61: #{tpu_custom_call.1} parent=55 // pred_check
          %p1588 = pneg %p206
        $region62: #{tpu_custom_call.1} parent=55 // pred_check_branch
          %1590 = sbr.rel (%p1588) target = $region64
        $region63: #{tpu_custom_call.1} parent=55 // pred_region
          %s1591 = sand.u32 %s191, 1
          %s1592 = scalar_lea.sflag [#allocation5], %s1591
          %s1593 = sand.u32 %s191, 1
          %s1594 = smul.addr %s1593, 128
          %s1595 = scalar_lea.vmem [#allocation4], %s1594
          %1596 = dma.done %s1592, 2048
        $region64: #{tpu_custom_call.1} parent=55 // pred_fallthru
          _
      $region56: #{tpu_custom_call.1} parent=5 // pred_fallthru
        _
    $region6: #{tpu_custom_call.1} parent=1 // loop_footer
      %s24 = sadd.s32 1, %s20
    $region7: #{tpu_custom_call.1} parent=1 // loop_footer_branch
      %19 = sbr.rel target = $region3
    $region8: #{tpu_custom_call.1} parent=1 // loop_exit
      _
    %1597 = vsyncpa [#allocation3], 1
    %s1598 = scalar_lea.sflag [#allocation3], 1
    %1599 = vsyncpa %s1598, 1
    %1600 = vsyncpa [#allocation5], 1
    %s1601 = scalar_lea.sflag [#allocation5], 1
    %1602 = vsyncpa %s1601, 1

</llo_original>
